<compile_context>
chip_gen: v6e
topology: v6e:2x2x1
jax: 0.10.0
libtpu: 0.0.40
codegen_flags: <defaults>
</compile_context>

<pallas_src>
import functools

import jax
import jax.numpy as jnp
from jax.experimental import pallas as pl
from jax.experimental.pallas import tpu as pltpu


def _round_up(n, m):
    return ((n + m - 1) // m) * m


def _pad2(a, rows, cols):
    return jnp.pad(a, ((0, rows - a.shape[0]), (0, cols - a.shape[1])))


def rnn_block_kernel(x_ref, w1x_ref, w1h_ref, b1_ref, w23_ref, b23_ref,
                     out_ref, h_ref, acc_ref, *, t_block, seq_len, needs_time_mask):
    # x_ref:   (t_block, Bs, Ep)  compute dtype
    # w1x_ref: (Ep, Hp), w1h_ref: (Hp, Hp), w23_ref: (Hp, Cp)  compute dtype
    # b1_ref:  (1, Hp) f32, b23_ref: (1, Cp) f32
    # out_ref: (Bs, Cp) f32
    # h_ref:   (Bs, Hp) f32 scratch, acc_ref: (Bs, Cp) f32 scratch
    t_idx = pl.program_id(1)

    @pl.when(t_idx == 0)
    def _init():
        h_ref[...] = jnp.zeros_like(h_ref)
        acc_ref[...] = jnp.full_like(acc_ref, -jnp.inf)

    tb, Bs, Ep = x_ref.shape
    Hp = w1h_ref.shape[0]

    # Hoisted input projection: one large MXU matmul per time block, bias folded in,
    # so the serial recurrence is just dot + relu + dot + max per step.
    x_blk = x_ref[...].reshape(tb * Bs, Ep)
    xproj = (jnp.dot(x_blk, w1x_ref[...], preferred_element_type=jnp.float32)
             + b1_ref[...])                                     # (tb*Bs, Hp) f32

    w1h = w1h_ref[...]
    w23 = w23_ref[...]
    b23 = b23_ref[...]
    cdt = w1h.dtype

    base_t = t_idx * t_block
    h = h_ref[...]
    acc = acc_ref[...]

    # Fully unrolled recurrence over the (small, static) time block.
    for i in range(t_block):
        pre = (jnp.dot(h.astype(cdt), w1h, preferred_element_type=jnp.float32)
               + xproj[i * Bs:(i + 1) * Bs, :])
        h = jnp.maximum(pre, 0.0)                               # relu(lin1(cat(x_t, h)))
        logits = (jnp.dot(h.astype(cdt), w23, preferred_element_type=jnp.float32)
                  + b23)                                        # fused lin2 . linear2
        if needs_time_mask:
            pad_bias = jnp.where(base_t + i < seq_len, 0.0, -jnp.inf)
            logits = logits + pad_bias.astype(jnp.float32)
        acc = jnp.maximum(acc, logits)                          # running max over time

    h_ref[...] = h
    acc_ref[...] = acc

    @pl.when(t_idx == pl.num_programs(1) - 1)
    def _finalize():
        out_ref[...] = acc


def rnn_forward(tokens, params, *, compute_dtype=jnp.float32,
                t_block=None, batch_shards=None):
    """tokens: (B, T) int32 -> (B, num_classes) float32 (max-pooled over time).

    Matches RNN(vocab, E, H, C, pad_idx).forward from the PyTorch spec
    (requires emb_dim == hidden_dim, as the torch Elman cell implicitly does).
    """
    emb = params["embedding"]                      # (V, E)
    w1x, w1h, b1 = params["w1x"], params["w1h"], params["b1"]
    w2, b2 = params["w2"], params["b2"]
    w3, b3 = params["w3"], params["b3"]

    B, T = tokens.shape
    E, H = w1x.shape
    C = w3.shape[1]

    itemsize = jnp.dtype(compute_dtype).itemsize
    sub = 8 if itemsize == 4 else 32 // itemsize   # sublane packing granularity

    if batch_shards is None:                       # use both TCs on v7x for big B
        batch_shards = 2 if B >= 2 * sub else 1

    Bp = _round_up(B, sub * batch_shards)
    Bs = Bp // batch_shards
    Ep = _round_up(E, 128)
    Hp = _round_up(H, 128)
    Cp = _round_up(C, 128)

    if t_block is None:
        budget = 4 * 1024 * 1024                   # <= ~4 MiB per x buffer
        t_block = max(1, min(T, budget // max(1, Bs * Ep * itemsize), 32))
    t_block = max(1, min(t_block, T))
    Tp = _round_up(T, t_block)
    n_t = Tp // t_block

    # ---- one-time parameter prep: exact lin2.linear2 fusion + padding ----
    w23 = w2 @ w3
    b23 = b2 @ w3 + b3
    w1x_p = _pad2(w1x, Ep, Hp).astype(compute_dtype)
    w1h_p = _pad2(w1h, Hp, Hp).astype(compute_dtype)
    b1_p = _pad2(b1, 1, Hp).astype(jnp.float32)
    w23_p = _pad2(w23, Hp, Cp).astype(compute_dtype)
    b23_p = _pad2(b23, 1, Cp).astype(jnp.float32)

    # Time-major embedding gather built directly (no (B,T,E)->(T,B,E) transpose).
    # TODO(synk): the embedding row gather stays in plain JAX; a Pallas version
    # would need a manual scalar-prefetch DMA-gather pipeline.
    x = emb[tokens.T].astype(compute_dtype)        # (T, B, E)
    x = jnp.pad(x, ((0, Tp - T), (0, Bp - B), (0, Ep - E)))

    kernel = functools.partial(
        rnn_block_kernel, t_block=t_block, seq_len=T,
        needs_time_mask=(Tp != T))

    # VMEM budget: double-buffered x chunk + resident weights + scratch + out.
    est = (2 * t_block * Bs * Ep * itemsize
           + 2 * (Ep * Hp + Hp * Hp + Hp * Cp) * itemsize
           + 2 * (Hp + Cp) * 4
           + (Bs * Hp + Bs * Cp) * 4
           + 2 * Bs * Cp * 4)
    vmem_limit = int(min(64 * 1024 * 1024, max(16 * 1024 * 1024, 2 * est)))

    out_padded = pl.pallas_call(
        kernel,
        out_shape=jax.ShapeDtypeStruct((Bp, Cp), jnp.float32),
        grid=(batch_shards, n_t),
        in_specs=[
            pl.BlockSpec((t_block, Bs, Ep), lambda b, t: (t, b, 0)),
            pl.BlockSpec((Ep, Hp), lambda b, t: (0, 0)),
            pl.BlockSpec((Hp, Hp), lambda b, t: (0, 0)),
            pl.BlockSpec((1, Hp), lambda b, t: (0, 0)),
            pl.BlockSpec((Hp, Cp), lambda b, t: (0, 0)),
            pl.BlockSpec((1, Cp), lambda b, t: (0, 0)),
        ],
        out_specs=pl.BlockSpec((Bs, Cp), lambda b, t: (b, 0)),
        scratch_shapes=[
            pltpu.VMEM((Bs, Hp), jnp.float32),     # h
            pltpu.VMEM((Bs, Cp), jnp.float32),     # running max (acc)
        ],
        compiler_params=pltpu.CompilerParams(
            dimension_semantics=("parallel", "arbitrary"),
            vmem_limit_bytes=vmem_limit,
        ),
    )(x, w1x_p, w1h_p, b1_p, w23_p, b23_p)

    return out_padded[:B, :C]


def make_params(key, vocab_size, emb_dim, hidden_dim, num_classes, pad_idx):
    ks = jax.random.split(key, 8)
    scale = 0.1
    emb = scale * jax.random.normal(ks[0], (vocab_size, emb_dim), jnp.float32)
    emb = emb.at[pad_idx].set(0.0)                 # padding_idx row is zero
    # Elman.lin1: Linear(emb_dim + hidden_dim, hidden_dim) split into x- and h- parts
    w1x = scale * jax.random.normal(ks[1], (emb_dim, hidden_dim), jnp.float32)
    w1h = scale * jax.random.normal(ks[2], (hidden_dim, hidden_dim), jnp.float32)
    b1 = scale * jax.random.normal(ks[3], (1, hidden_dim), jnp.float32)
    # Elman.lin2: Linear(hidden_dim, hidden_dim)
    w2 = scale * jax.random.normal(ks[4], (hidden_dim, hidden_dim), jnp.float32)
    b2 = scale * jax.random.normal(ks[5], (1, hidden_dim), jnp.float32)
    # RNN.linear2: Linear(hidden_dim, num_classes)
    w3 = scale * jax.random.normal(ks[6], (hidden_dim, num_classes), jnp.float32)
    b3 = scale * jax.random.normal(ks[7], (1, num_classes), jnp.float32)
    return dict(embedding=emb, w1x=w1x, w1h=w1h, b1=b1, w2=w2, b2=b2, w3=w3, b3=b3)


def reference_forward(tokens, params):
    """Pure-JAX replica of the PyTorch forward (unfused, f32) for verification."""
    x = params["embedding"][tokens]                # (B, T, E)
    B, T, E = x.shape
    H = params["w1h"].shape[0]
    h = jnp.zeros((B, H), jnp.float32)
    outs = []
    for i in range(T):
        pre = x[:, i, :] @ params["w1x"] + h @ params["w1h"] + params["b1"]
        h = jnp.maximum(pre, 0.0)
        o = h @ params["w2"] + params["b2"]
        outs.append(o[:, None, :])
    o_l2 = jnp.concatenate(outs, axis=1)           # (B, T, H)
    logits = o_l2 @ params["w3"] + params["b3"]    # (B, T, C)
    return jnp.max(logits, axis=1)                 # (B, C)


if __name__ == "__main__":
    # Small shapes consistent with the module. NOTE: the torch Elman cell only
    # works when emb_dim == hidden_dim (initial hidden has emb_dim width).
    vocab_size, emb_dim, hidden_dim, num_classes, pad_idx = 50, 32, 32, 8, 0
    batch, time = 2, 8

    key = jax.random.PRNGKey(0)
    pkey, tkey = jax.random.split(key)
    params = make_params(pkey, vocab_size, emb_dim, hidden_dim, num_classes, pad_idx)

    tokens = jax.random.randint(tkey, (batch, time), 0, vocab_size, dtype=jnp.int32)
    tokens = tokens.at[:, -2:].set(pad_idx)        # exercise padding rows

    ref = reference_forward(tokens, params)

    # f32 path (exact match with the reference).
    out = jax.block_until_ready(rnn_forward(tokens, params,
                                            compute_dtype=jnp.float32))
    assert out.shape == (batch, num_classes)
    assert jnp.allclose(out, ref, atol=1e-5, rtol=1e-5), (out, ref)

    # bf16 matmul operands (v6e/v7x MXU path), f32 accumulation — loose tolerance.
    out_bf16 = jax.block_until_ready(rnn_forward(tokens, params,
                                                 compute_dtype=jnp.bfloat16))
    assert out_bf16.shape == (batch, num_classes)
    assert jnp.allclose(out_bf16, ref, atol=5e-2, rtol=5e-2), (out_bf16, ref)

    print("KERNEL_OK")
</pallas_src>

<mosaic_0001>
module attributes {stable_mosaic.version = 11 : i64} {
  func.func @rnn_block_kernel(%arg0: i32, %arg1: i32, %arg2: memref<8x8x128xf32, #tpu.memory_space<vmem>>, %arg3: memref<128x128xf32, #tpu.memory_space<vmem>>, %arg4: memref<128x128xf32, #tpu.memory_space<vmem>>, %arg5: memref<1x128xf32, #tpu.memory_space<vmem>>, %arg6: memref<128x128xf32, #tpu.memory_space<vmem>>, %arg7: memref<1x128xf32, #tpu.memory_space<vmem>>, %arg8: memref<8x128xf32, #tpu.memory_space<vmem>>, %arg9: memref<8x128xf32, #tpu.memory_space<vmem>>, %arg10: memref<8x128xf32, #tpu.memory_space<vmem>>) attributes {dimension_semantics = [#tpu.dimension_semantics<parallel>, #tpu.dimension_semantics<arbitrary>], iteration_bounds = array<i64: 1, 1>, scalar_prefetch = 0 : i64, scratch_operands = 2 : i64, tpu.core_type = #tpu.core_type<tc>, window_params = [{transform_indices = @transform_0, window_bounds = array<i64: 8, 8, 128>}, {pipeline_mode = #tpu.pipeline_mode<synchronous>, transform_indices = @transform_1, window_bounds = array<i64: 128, 128>}, {pipeline_mode = #tpu.pipeline_mode<synchronous>, transform_indices = @transform_2, window_bounds = array<i64: 128, 128>}, {pipeline_mode = #tpu.pipeline_mode<synchronous>, transform_indices = @transform_3, window_bounds = array<i64: 1, 128>}, {pipeline_mode = #tpu.pipeline_mode<synchronous>, transform_indices = @transform_4, window_bounds = array<i64: 128, 128>}, {pipeline_mode = #tpu.pipeline_mode<synchronous>, transform_indices = @transform_5, window_bounds = array<i64: 1, 128>}, {transform_indices = @transform_6, window_bounds = array<i64: 8, 128>}]} {
    %c0_i32 = arith.constant 0 : i32
    %0 = arith.cmpi eq, %arg1, %c0_i32 : i32
    %1 = arith.extui %0 : i1 to i32
    %c0_i32_0 = arith.constant 0 : i32
    %2 = arith.cmpi ne, %1, %c0_i32_0 : i32
    scf.if %2 {
      %cst_47 = arith.constant 0.000000e+00 : f32
      %92 = vector.broadcast %cst_47 : f32 to vector<8x128xf32>
      %c0_48 = arith.constant 0 : index
      %c0_49 = arith.constant 0 : index
      %93 = vector.load %arg9[%c0_48, %c0_49] : memref<8x128xf32, #tpu.memory_space<vmem>>, vector<8x128xf32>
      tpu.vector_store %arg9[%c0_48, %c0_49], %92 {strides = array<i32>} : memref<8x128xf32, #tpu.memory_space<vmem>>, vector<8x128xf32>,
      %cst_50 = arith.constant 0xFF800000 : f32
      %94 = vector.broadcast %cst_50 : f32 to vector<8x128xf32>
      %c0_51 = arith.constant 0 : index
      %c0_52 = arith.constant 0 : index
      %95 = vector.load %arg10[%c0_51, %c0_52] : memref<8x128xf32, #tpu.memory_space<vmem>>, vector<8x128xf32>
      tpu.vector_store %arg10[%c0_51, %c0_52], %94 {strides = array<i32>} : memref<8x128xf32, #tpu.memory_space<vmem>>, vector<8x128xf32>,
    } else {
    }
    %c0 = arith.constant 0 : index
    %c0_1 = arith.constant 0 : index
    %c0_2 = arith.constant 0 : index
    %3 = vector.load %arg2[%c0, %c0_1, %c0_2] : memref<8x8x128xf32, #tpu.memory_space<vmem>>, vector<8x8x128xf32>
    %4 = vector.shape_cast %3 : vector<8x8x128xf32> to vector<64x128xf32>
    %c0_3 = arith.constant 0 : index
    %c0_4 = arith.constant 0 : index
    %5 = vector.load %arg3[%c0_3, %c0_4] : memref<128x128xf32, #tpu.memory_space<vmem>>, vector<128x128xf32>
    %cst = arith.constant dense<0.000000e+00> : vector<64x128xf32>
    %6 = tpu.matmul %4, %5, %cst {dimension_numbers = #tpu.dot_dimension_numbers<[1], [0], [0], [1], [0, 0, 1, 1], [], []>} : vector<64x128xf32>, vector<128x128xf32>, vector<64x128xf32> -> vector<64x128xf32>
    %c0_5 = arith.constant 0 : index
    %c0_6 = arith.constant 0 : index
    %7 = vector.load %arg5[%c0_5, %c0_6] : memref<1x128xf32, #tpu.memory_space<vmem>>, vector<1x128xf32>
    %8 = vector.broadcast %7 : vector<1x128xf32> to vector<64x128xf32>
    %9 = arith.addf %6, %8 : vector<64x128xf32>
    %c0_7 = arith.constant 0 : index
    %c0_8 = arith.constant 0 : index
    %10 = vector.load %arg4[%c0_7, %c0_8] : memref<128x128xf32, #tpu.memory_space<vmem>>, vector<128x128xf32>
    %c0_9 = arith.constant 0 : index
    %c0_10 = arith.constant 0 : index
    %11 = vector.load %arg6[%c0_9, %c0_10] : memref<128x128xf32, #tpu.memory_space<vmem>>, vector<128x128xf32>
    %c0_11 = arith.constant 0 : index
    %c0_12 = arith.constant 0 : index
    %12 = vector.load %arg7[%c0_11, %c0_12] : memref<1x128xf32, #tpu.memory_space<vmem>>, vector<1x128xf32>
    %c0_13 = arith.constant 0 : index
    %c0_14 = arith.constant 0 : index
    %13 = vector.load %arg9[%c0_13, %c0_14] : memref<8x128xf32, #tpu.memory_space<vmem>>, vector<8x128xf32>
    %c0_15 = arith.constant 0 : index
    %c0_16 = arith.constant 0 : index
    %14 = vector.load %arg10[%c0_15, %c0_16] : memref<8x128xf32, #tpu.memory_space<vmem>>, vector<8x128xf32>
    %cst_17 = arith.constant dense<0.000000e+00> : vector<8x128xf32>
    %15 = tpu.matmul %13, %10, %cst_17 {dimension_numbers = #tpu.dot_dimension_numbers<[1], [0], [0], [1], [0, 0, 1, 1], [], []>} : vector<8x128xf32>, vector<128x128xf32>, vector<8x128xf32> -> vector<8x128xf32>
    %16 = vector.extract_strided_slice %9 {offsets = [0, 0], sizes = [8, 128], strides = [1, 1]} : vector<64x128xf32> to vector<8x128xf32>
    %17 = arith.addf %15, %16 : vector<8x128xf32>
    %cst_18 = arith.constant 0.000000e+00 : f32
    %18 = vector.broadcast %cst_18 : f32 to vector<8x128xf32>
    %19 = arith.maximumf %17, %18 : vector<8x128xf32>
    %cst_19 = arith.constant dense<0.000000e+00> : vector<8x128xf32>
    %20 = tpu.matmul %19, %11, %cst_19 {dimension_numbers = #tpu.dot_dimension_numbers<[1], [0], [0], [1], [0, 0, 1, 1], [], []>} : vector<8x128xf32>, vector<128x128xf32>, vector<8x128xf32> -> vector<8x128xf32>
    %21 = vector.broadcast %12 : vector<1x128xf32> to vector<8x128xf32>
    %22 = arith.addf %20, %21 : vector<8x128xf32>
    %23 = arith.maximumf %14, %22 : vector<8x128xf32>
    %cst_20 = arith.constant dense<0.000000e+00> : vector<8x128xf32>
    %24 = tpu.matmul %19, %10, %cst_20 {dimension_numbers = #tpu.dot_dimension_numbers<[1], [0], [0], [1], [0, 0, 1, 1], [], []>} : vector<8x128xf32>, vector<128x128xf32>, vector<8x128xf32> -> vector<8x128xf32>
    %25 = vector.extract_strided_slice %9 {offsets = [8, 0], sizes = [8, 128], strides = [1, 1]} : vector<64x128xf32> to vector<8x128xf32>
    %26 = arith.addf %24, %25 : vector<8x128xf32>
    %cst_21 = arith.constant 0.000000e+00 : f32
    %27 = vector.broadcast %cst_21 : f32 to vector<8x128xf32>
    %28 = arith.maximumf %26, %27 : vector<8x128xf32>
    %cst_22 = arith.constant dense<0.000000e+00> : vector<8x128xf32>
    %29 = tpu.matmul %28, %11, %cst_22 {dimension_numbers = #tpu.dot_dimension_numbers<[1], [0], [0], [1], [0, 0, 1, 1], [], []>} : vector<8x128xf32>, vector<128x128xf32>, vector<8x128xf32> -> vector<8x128xf32>
    %30 = vector.broadcast %12 : vector<1x128xf32> to vector<8x128xf32>
    %31 = arith.addf %29, %30 : vector<8x128xf32>
    %32 = arith.maximumf %23, %31 : vector<8x128xf32>
    %cst_23 = arith.constant dense<0.000000e+00> : vector<8x128xf32>
    %33 = tpu.matmul %28, %10, %cst_23 {dimension_numbers = #tpu.dot_dimension_numbers<[1], [0], [0], [1], [0, 0, 1, 1], [], []>} : vector<8x128xf32>, vector<128x128xf32>, vector<8x128xf32> -> vector<8x128xf32>
    %34 = vector.extract_strided_slice %9 {offsets = [16, 0], sizes = [8, 128], strides = [1, 1]} : vector<64x128xf32> to vector<8x128xf32>
    %35 = arith.addf %33, %34 : vector<8x128xf32>
    %cst_24 = arith.constant 0.000000e+00 : f32
    %36 = vector.broadcast %cst_24 : f32 to vector<8x128xf32>
    %37 = arith.maximumf %35, %36 : vector<8x128xf32>
    %cst_25 = arith.constant dense<0.000000e+00> : vector<8x128xf32>
    %38 = tpu.matmul %37, %11, %cst_25 {dimension_numbers = #tpu.dot_dimension_numbers<[1], [0], [0], [1], [0, 0, 1, 1], [], []>} : vector<8x128xf32>, vector<128x128xf32>, vector<8x128xf32> -> vector<8x128xf32>
    %39 = vector.broadcast %12 : vector<1x128xf32> to vector<8x128xf32>
    %40 = arith.addf %38, %39 : vector<8x128xf32>
    %41 = arith.maximumf %32, %40 : vector<8x128xf32>
    %cst_26 = arith.constant dense<0.000000e+00> : vector<8x128xf32>
    %42 = tpu.matmul %37, %10, %cst_26 {dimension_numbers = #tpu.dot_dimension_numbers<[1], [0], [0], [1], [0, 0, 1, 1], [], []>} : vector<8x128xf32>, vector<128x128xf32>, vector<8x128xf32> -> vector<8x128xf32>
    %43 = vector.extract_strided_slice %9 {offsets = [24, 0], sizes = [8, 128], strides = [1, 1]} : vector<64x128xf32> to vector<8x128xf32>
    %44 = arith.addf %42, %43 : vector<8x128xf32>
    %cst_27 = arith.constant 0.000000e+00 : f32
    %45 = vector.broadcast %cst_27 : f32 to vector<8x128xf32>
    %46 = arith.maximumf %44, %45 : vector<8x128xf32>
    %cst_28 = arith.constant dense<0.000000e+00> : vector<8x128xf32>
    %47 = tpu.matmul %46, %11, %cst_28 {dimension_numbers = #tpu.dot_dimension_numbers<[1], [0], [0], [1], [0, 0, 1, 1], [], []>} : vector<8x128xf32>, vector<128x128xf32>, vector<8x128xf32> -> vector<8x128xf32>
    %48 = vector.broadcast %12 : vector<1x128xf32> to vector<8x128xf32>
    %49 = arith.addf %47, %48 : vector<8x128xf32>
    %50 = arith.maximumf %41, %49 : vector<8x128xf32>
    %cst_29 = arith.constant dense<0.000000e+00> : vector<8x128xf32>
    %51 = tpu.matmul %46, %10, %cst_29 {dimension_numbers = #tpu.dot_dimension_numbers<[1], [0], [0], [1], [0, 0, 1, 1], [], []>} : vector<8x128xf32>, vector<128x128xf32>, vector<8x128xf32> -> vector<8x128xf32>
    %52 = vector.extract_strided_slice %9 {offsets = [32, 0], sizes = [8, 128], strides = [1, 1]} : vector<64x128xf32> to vector<8x128xf32>
    %53 = arith.addf %51, %52 : vector<8x128xf32>
    %cst_30 = arith.constant 0.000000e+00 : f32
    %54 = vector.broadcast %cst_30 : f32 to vector<8x128xf32>
    %55 = arith.maximumf %53, %54 : vector<8x128xf32>
    %cst_31 = arith.constant dense<0.000000e+00> : vector<8x128xf32>
    %56 = tpu.matmul %55, %11, %cst_31 {dimension_numbers = #tpu.dot_dimension_numbers<[1], [0], [0], [1], [0, 0, 1, 1], [], []>} : vector<8x128xf32>, vector<128x128xf32>, vector<8x128xf32> -> vector<8x128xf32>
    %57 = vector.broadcast %12 : vector<1x128xf32> to vector<8x128xf32>
    %58 = arith.addf %56, %57 : vector<8x128xf32>
    %59 = arith.maximumf %50, %58 : vector<8x128xf32>
    %cst_32 = arith.constant dense<0.000000e+00> : vector<8x128xf32>
    %60 = tpu.matmul %55, %10, %cst_32 {dimension_numbers = #tpu.dot_dimension_numbers<[1], [0], [0], [1], [0, 0, 1, 1], [], []>} : vector<8x128xf32>, vector<128x128xf32>, vector<8x128xf32> -> vector<8x128xf32>
    %61 = vector.extract_strided_slice %9 {offsets = [40, 0], sizes = [8, 128], strides = [1, 1]} : vector<64x128xf32> to vector<8x128xf32>
    %62 = arith.addf %60, %61 : vector<8x128xf32>
    %cst_33 = arith.constant 0.000000e+00 : f32
    %63 = vector.broadcast %cst_33 : f32 to vector<8x128xf32>
    %64 = arith.maximumf %62, %63 : vector<8x128xf32>
    %cst_34 = arith.constant dense<0.000000e+00> : vector<8x128xf32>
    %65 = tpu.matmul %64, %11, %cst_34 {dimension_numbers = #tpu.dot_dimension_numbers<[1], [0], [0], [1], [0, 0, 1, 1], [], []>} : vector<8x128xf32>, vector<128x128xf32>, vector<8x128xf32> -> vector<8x128xf32>
    %66 = vector.broadcast %12 : vector<1x128xf32> to vector<8x128xf32>
    %67 = arith.addf %65, %66 : vector<8x128xf32>
    %68 = arith.maximumf %59, %67 : vector<8x128xf32>
    %cst_35 = arith.constant dense<0.000000e+00> : vector<8x128xf32>
    %69 = tpu.matmul %64, %10, %cst_35 {dimension_numbers = #tpu.dot_dimension_numbers<[1], [0], [0], [1], [0, 0, 1, 1], [], []>} : vector<8x128xf32>, vector<128x128xf32>, vector<8x128xf32> -> vector<8x128xf32>
    %70 = vector.extract_strided_slice %9 {offsets = [48, 0], sizes = [8, 128], strides = [1, 1]} : vector<64x128xf32> to vector<8x128xf32>
    %71 = arith.addf %69, %70 : vector<8x128xf32>
    %cst_36 = arith.constant 0.000000e+00 : f32
    %72 = vector.broadcast %cst_36 : f32 to vector<8x128xf32>
    %73 = arith.maximumf %71, %72 : vector<8x128xf32>
    %cst_37 = arith.constant dense<0.000000e+00> : vector<8x128xf32>
    %74 = tpu.matmul %73, %11, %cst_37 {dimension_numbers = #tpu.dot_dimension_numbers<[1], [0], [0], [1], [0, 0, 1, 1], [], []>} : vector<8x128xf32>, vector<128x128xf32>, vector<8x128xf32> -> vector<8x128xf32>
    %75 = vector.broadcast %12 : vector<1x128xf32> to vector<8x128xf32>
    %76 = arith.addf %74, %75 : vector<8x128xf32>
    %77 = arith.maximumf %68, %76 : vector<8x128xf32>
    %cst_38 = arith.constant dense<0.000000e+00> : vector<8x128xf32>
    %78 = tpu.matmul %73, %10, %cst_38 {dimension_numbers = #tpu.dot_dimension_numbers<[1], [0], [0], [1], [0, 0, 1, 1], [], []>} : vector<8x128xf32>, vector<128x128xf32>, vector<8x128xf32> -> vector<8x128xf32>
    %79 = vector.extract_strided_slice %9 {offsets = [56, 0], sizes = [8, 128], strides = [1, 1]} : vector<64x128xf32> to vector<8x128xf32>
    %80 = arith.addf %78, %79 : vector<8x128xf32>
    %cst_39 = arith.constant 0.000000e+00 : f32
    %81 = vector.broadcast %cst_39 : f32 to vector<8x128xf32>
    %82 = arith.maximumf %80, %81 : vector<8x128xf32>
    %cst_40 = arith.constant dense<0.000000e+00> : vector<8x128xf32>
    %83 = tpu.matmul %82, %11, %cst_40 {dimension_numbers = #tpu.dot_dimension_numbers<[1], [0], [0], [1], [0, 0, 1, 1], [], []>} : vector<8x128xf32>, vector<128x128xf32>, vector<8x128xf32> -> vector<8x128xf32>
    %84 = vector.broadcast %12 : vector<1x128xf32> to vector<8x128xf32>
    %85 = arith.addf %83, %84 : vector<8x128xf32>
    %86 = arith.maximumf %77, %85 : vector<8x128xf32>
    %c0_41 = arith.constant 0 : index
    %c0_42 = arith.constant 0 : index
    %87 = vector.load %arg9[%c0_41, %c0_42] : memref<8x128xf32, #tpu.memory_space<vmem>>, vector<8x128xf32>
    tpu.vector_store %arg9[%c0_41, %c0_42], %82 {strides = array<i32>} : memref<8x128xf32, #tpu.memory_space<vmem>>, vector<8x128xf32>,
    %c0_43 = arith.constant 0 : index
    %c0_44 = arith.constant 0 : index
    %88 = vector.load %arg10[%c0_43, %c0_44] : memref<8x128xf32, #tpu.memory_space<vmem>>, vector<8x128xf32>
    tpu.vector_store %arg10[%c0_43, %c0_44], %86 {strides = array<i32>} : memref<8x128xf32, #tpu.memory_space<vmem>>, vector<8x128xf32>,
    %c0_i32_45 = arith.constant 0 : i32
    %89 = arith.cmpi eq, %arg1, %c0_i32_45 : i32
    %90 = arith.extui %89 : i1 to i32
    %c0_i32_46 = arith.constant 0 : i32
    %91 = arith.cmpi ne, %90, %c0_i32_46 : i32
    scf.if %91 {
      %c0_47 = arith.constant 0 : index
      %c0_48 = arith.constant 0 : index
      %92 = vector.load %arg8[%c0_47, %c0_48] : memref<8x128xf32, #tpu.memory_space<vmem>>, vector<8x128xf32>
      tpu.vector_store %arg8[%c0_47, %c0_48], %86 {strides = array<i32>} : memref<8x128xf32, #tpu.memory_space<vmem>>, vector<8x128xf32>,
    } else {
    }
    return
  }
  func.func @transform_0(%arg0: i32, %arg1: i32) -> (i32, i32, i32) {
    %c0_i32 = arith.constant 0 : i32
    %c0_i32_0 = arith.constant 0 : i32
    return %arg1, %arg0, %c0_i32 : i32, i32, i32
  }
  func.func @transform_1(%arg0: i32, %arg1: i32) -> (i32, i32) {
    %c0_i32 = arith.constant 0 : i32
    %c0_i32_0 = arith.constant 0 : i32
    %c0_i32_1 = arith.constant 0 : i32
    return %c0_i32, %c0_i32_0 : i32, i32
  }
  func.func @transform_2(%arg0: i32, %arg1: i32) -> (i32, i32) {
    %c0_i32 = arith.constant 0 : i32
    %c0_i32_0 = arith.constant 0 : i32
    %c0_i32_1 = arith.constant 0 : i32
    return %c0_i32, %c0_i32_0 : i32, i32
  }
  func.func @transform_3(%arg0: i32, %arg1: i32) -> (i32, i32) {
    %c0_i32 = arith.constant 0 : i32
    %c0_i32_0 = arith.constant 0 : i32
    %c0_i32_1 = arith.constant 0 : i32
    return %c0_i32, %c0_i32_0 : i32, i32
  }
  func.func @transform_4(%arg0: i32, %arg1: i32) -> (i32, i32) {
    %c0_i32 = arith.constant 0 : i32
    %c0_i32_0 = arith.constant 0 : i32
    %c0_i32_1 = arith.constant 0 : i32
    return %c0_i32, %c0_i32_0 : i32, i32
  }
  func.func @transform_5(%arg0: i32, %arg1: i32) -> (i32, i32) {
    %c0_i32 = arith.constant 0 : i32
    %c0_i32_0 = arith.constant 0 : i32
    %c0_i32_1 = arith.constant 0 : i32
    return %c0_i32, %c0_i32_0 : i32, i32
  }
  func.func @transform_6(%arg0: i32, %arg1: i32) -> (i32, i32) {
    %c0_i32 = arith.constant 0 : i32
    %c0_i32_0 = arith.constant 0 : i32
    return %arg0, %c0_i32 : i32, i32
  }
}

</mosaic_0001>

<llo_original>
// kernel: tpu_custom_call.1
$region0: #{tpu_custom_call.1}
  #allocation0 [shape = 'u32[]', space=smem, size = 0x4, offset = 0x4, fixed_abs, tag = 'smem constant byte address 0x4 - core index']
  #allocation1 [shape = 'u32[144,128]{1,0:T(1,128)}', space=vmem, size = 0x12000, scoped, tag = 'internal scratch']
  #allocation2 [shape = 'f32[8,128]{1,0:T(8,128)}', space=vmem, size = 0x1000, scoped, tag = 'scratch operand']
  #allocation3 [shape = 'f32[8,128]{1,0:T(8,128)}', space=vmem, size = 0x1000, scoped, tag = 'scratch operand']
  %s0 = inlined_call_operand.hbm [shape: f32[8,8,128], index: 0, kind: input, shape index: {}]
  %s1 = inlined_call_operand.hbm [shape: f32[128,128], index: 1, kind: input, shape index: {}]
  %s2 = inlined_call_operand.hbm [shape: f32[128,128], index: 2, kind: input, shape index: {}]
  %s3 = inlined_call_operand.vmem [shape: f32[1,128], index: 3, kind: input, shape index: {}]
  %s4 = inlined_call_operand.hbm [shape: f32[128,128], index: 4, kind: input, shape index: {}]
  %s5 = inlined_call_operand.vmem [shape: f32[1,128], index: 5, kind: input, shape index: {}]
  %s6 = inlined_call_operand.hbm [shape: f32[8,128], index: 6, kind: output, shape index: {}]
  %s7 = sld [smem:[#allocation0]]
  $region58: #{tpu_custom_call.1} parent=0
    _
  %s9 = ssub.s32 1, %s7
  %s10 = scalar_select 0, %s9, %s7
  $region1: #{tpu_custom_call.1} parent=0
    #allocation4 [shape = 'u8[32768]{0}', space=vmem, size = 0x8000, scoped, tag = 'input window, operand 0, single buffered']
    #allocation5 [shape = 's32[1]{0}', space=sflag, size = 0x4, scoped, tag = 'scoped memory for tpu_custom_call.1']
    #allocation6 [shape = 's32[1]{0}', space=sflag, size = 0x4, scoped, tag = 'scoped memory for tpu_custom_call.1']
    #allocation7 [shape = 'u8[65536]{0}', space=vmem, size = 0x10000, scoped, tag = 'input window, operand 1, single buffered']
    #allocation8 [shape = 's32[1]{0}', space=sflag, size = 0x4, scoped, tag = 'scoped memory for tpu_custom_call.1']
    #allocation9 [shape = 'u8[65536]{0}', space=vmem, size = 0x10000, scoped, tag = 'input window, operand 2, single buffered']
    #allocation10 [shape = 'u8[65536]{0}', space=vmem, size = 0x10000, scoped, tag = 'input window, operand 4, single buffered']
    #allocation11 [shape = 's32[1]{0}', space=sflag, size = 0x4, scoped, tag = 'scoped memory for tpu_custom_call.1']
    #allocation12 [shape = 'u8[4096]{0}', space=vmem, size = 0x1000, scoped, tag = 'output window, operand 0, single buffered']
    %11 = vsyncpa [#allocation5], 0
    %12 = vsyncpa [#allocation8], 0
    %13 = vsyncpa [#allocation11], 0
    %14 = vsyncpa [#allocation6], 0
    // Predicated region
    $region2: #{tpu_custom_call.1} parent=1 // pred_check
      _
    $region3: #{tpu_custom_call.1} parent=1 // pred_check_branch
      %16 = sbr.rel (0) target = $region5
    $region4: #{tpu_custom_call.1} parent=1 // pred_region
      %s18 = ssub.s32 1024, 1024
      %19 = vsyncadd [#allocation5], %s18
      %s20 = sshll.u32 [#allocation4], 4
      %s21 = int_to_ptr.vmem [resolvable:$true] %s20
      %26 = dma.hbm_to_vmem [thread:$0]  %s0, 1024, %s21, [#allocation5], 128, 128, 8
    $region5: #{tpu_custom_call.1} parent=1 // pred_fallthru
      _
    // Predicated region
    $region6: #{tpu_custom_call.1} parent=1 // pred_check
      _
    $region7: #{tpu_custom_call.1} parent=1 // pred_check_branch
      %28 = sbr.rel (0) target = $region9
    $region8: #{tpu_custom_call.1} parent=1 // pred_region
      %s30 = ssub.s32 2048, 2048
      %31 = vsyncadd [#allocation8], %s30
      %s32 = sshll.u32 [#allocation7], 4
      %s33 = int_to_ptr.vmem [resolvable:$true] %s32
      %38 = dma.hbm_to_vmem [thread:$0]  %s1, 2048, %s33, [#allocation8], 128, 128, 8
    $region9: #{tpu_custom_call.1} parent=1 // pred_fallthru
      _
    // Predicated region
    $region10: #{tpu_custom_call.1} parent=1 // pred_check
      _
    $region11: #{tpu_custom_call.1} parent=1 // pred_check_branch
      %40 = sbr.rel (0) target = $region13
    $region12: #{tpu_custom_call.1} parent=1 // pred_region
      %s42 = ssub.s32 2048, 2048
      %43 = vsyncadd [#allocation8], %s42
      %s44 = sshll.u32 [#allocation9], 4
      %s45 = int_to_ptr.vmem [resolvable:$true] %s44
      %50 = dma.hbm_to_vmem [thread:$0]  %s2, 2048, %s45, [#allocation8], 128, 128, 8
    $region13: #{tpu_custom_call.1} parent=1 // pred_fallthru
      _
    // Predicated region
    $region14: #{tpu_custom_call.1} parent=1 // pred_check
      _
    $region15: #{tpu_custom_call.1} parent=1 // pred_check_branch
      %52 = sbr.rel (0) target = $region17
    $region16: #{tpu_custom_call.1} parent=1 // pred_region
      _
    $region17: #{tpu_custom_call.1} parent=1 // pred_fallthru
      _
    // Predicated region
    $region18: #{tpu_custom_call.1} parent=1 // pred_check
      _
    $region19: #{tpu_custom_call.1} parent=1 // pred_check_branch
      %54 = sbr.rel (0) target = $region21
    $region20: #{tpu_custom_call.1} parent=1 // pred_region
      %s56 = ssub.s32 2048, 2048
      %57 = vsyncadd [#allocation11], %s56
      %s58 = sshll.u32 [#allocation10], 4
      %s59 = int_to_ptr.vmem [resolvable:$true] %s58
      %64 = dma.hbm_to_vmem [thread:$0]  %s4, 2048, %s59, [#allocation11], 128, 128, 8
    $region21: #{tpu_custom_call.1} parent=1 // pred_fallthru
      _
    // Predicated region
    $region22: #{tpu_custom_call.1} parent=1 // pred_check
      _
    $region23: #{tpu_custom_call.1} parent=1 // pred_check_branch
      %66 = sbr.rel (0) target = $region25
    $region24: #{tpu_custom_call.1} parent=1 // pred_region
      _
    $region25: #{tpu_custom_call.1} parent=1 // pred_fallthru
      _
    // Predicated region
    $region26: #{tpu_custom_call.1} parent=1 // pred_check
      _
    $region27: #{tpu_custom_call.1} parent=1 // pred_check_branch
      %68 = sbr.rel (0) target = $region29
    $region28: #{tpu_custom_call.1} parent=1 // pred_region
      %69 = dma.done [#allocation5], 1024
    $region29: #{tpu_custom_call.1} parent=1 // pred_fallthru
      _
    // Predicated region
    $region30: #{tpu_custom_call.1} parent=1 // pred_check
      _
    $region31: #{tpu_custom_call.1} parent=1 // pred_check_branch
      %71 = sbr.rel (0) target = $region33
    $region32: #{tpu_custom_call.1} parent=1 // pred_region
      %72 = dma.done [#allocation8], 2048
    $region33: #{tpu_custom_call.1} parent=1 // pred_fallthru
      _
    // Predicated region
    $region34: #{tpu_custom_call.1} parent=1 // pred_check
      _
    $region35: #{tpu_custom_call.1} parent=1 // pred_check_branch
      %74 = sbr.rel (0) target = $region37
    $region36: #{tpu_custom_call.1} parent=1 // pred_region
      %75 = dma.done [#allocation8], 2048
    $region37: #{tpu_custom_call.1} parent=1 // pred_fallthru
      _
    // Predicated region
    $region38: #{tpu_custom_call.1} parent=1 // pred_check
      _
    $region39: #{tpu_custom_call.1} parent=1 // pred_check_branch
      %77 = sbr.rel (0) target = $region41
    $region40: #{tpu_custom_call.1} parent=1 // pred_region
      %78 = dma.done [#allocation11], 2048
    $region41: #{tpu_custom_call.1} parent=1 // pred_fallthru
      _
    %p79 = scmp.eq.s32.totalorder 0, 0
    // Predicated region
    $region42: #{tpu_custom_call.1} parent=1 // pred_check
      %p80 = pneg %p79
    $region43: #{tpu_custom_call.1} parent=1 // pred_check_branch
      %82 = sbr.rel (%p80) target = $region45
    $region44: #{tpu_custom_call.1} parent=1 // pred_region
      %83 = vst [vmem:[#allocation2] sm:$0xff] 0.0
      %84 = vst [vmem:[#allocation3] sm:$0xff] -inf
    $region45: #{tpu_custom_call.1} parent=1 // pred_fallthru
      _
    %v85 = vld [vmem:[#allocation4] sm:$0xff]
    %v86 = vld [vmem:[#allocation4 + $0x8] sm:$0xff]
    %v87 = vld [vmem:[#allocation4 + $0x10] sm:$0xff]
    %v88 = vld [vmem:[#allocation4 + $0x18] sm:$0xff]
    %v89 = vld [vmem:[#allocation4 + $0x20] sm:$0xff]
    %v90 = vld [vmem:[#allocation4 + $0x28] sm:$0xff]
    %v91 = vld [vmem:[#allocation4 + $0x30] sm:$0xff]
    %v92 = vld [vmem:[#allocation4 + $0x38] sm:$0xff]
    %v93 = vld [vmem:[#allocation7] sm:$0xff]
    %v94 = vld [vmem:[#allocation7 + $0x8] sm:$0xff]
    %v95 = vld [vmem:[#allocation7 + $0x10] sm:$0xff]
    %v96 = vld [vmem:[#allocation7 + $0x18] sm:$0xff]
    %v97 = vld [vmem:[#allocation7 + $0x20] sm:$0xff]
    %v98 = vld [vmem:[#allocation7 + $0x28] sm:$0xff]
    %v99 = vld [vmem:[#allocation7 + $0x30] sm:$0xff]
    %v100 = vld [vmem:[#allocation7 + $0x38] sm:$0xff]
    %v101 = vld [vmem:[#allocation7 + $0x40] sm:$0xff]
    %v102 = vld [vmem:[#allocation7 + $0x48] sm:$0xff]
    %v103 = vld [vmem:[#allocation7 + $0x50] sm:$0xff]
    %v104 = vld [vmem:[#allocation7 + $0x58] sm:$0xff]
    %v105 = vld [vmem:[#allocation7 + $0x60] sm:$0xff]
    %v106 = vld [vmem:[#allocation7 + $0x68] sm:$0xff]
    %v107 = vld [vmem:[#allocation7 + $0x70] sm:$0xff]
    %v108 = vld [vmem:[#allocation7 + $0x78] sm:$0xff]
    %v109 = vld [vmem:[%s3] sm:$0x1]
    %v111 = vlaneseq
    %v112 = vshrl.u32 %v111, 7
    %v113 = vsub.s32 0, %v112
    %v114 = vrot.slane %v109, %v113
    %116 = vmatprep.subr.mxu0 0.0
    %117 = vmatpush1.msra.mxu0 %v108
    %118 = vmatprep.subr.mxu0 0.0
    %119 = vmatpush1.msra.mxu0 %v107
    %120 = vmatprep.subr.mxu0 0.0
    %121 = vmatpush1.msra.mxu0 %v106
    %122 = vmatprep.subr.mxu0 0.0
    %123 = vmatpush1.msra.mxu0 %v105
    %124 = vmatprep.subr.mxu0 0.0
    %125 = vmatpush1.msra.mxu0 %v104
    %126 = vmatprep.subr.mxu0 0.0
    %127 = vmatpush1.msra.mxu0 %v103
    %128 = vmatprep.subr.mxu0 0.0
    %129 = vmatpush1.msra.mxu0 %v102
    %130 = vmatprep.subr.mxu0 0.0
    %131 = vmatpush1.msra.mxu0 %v101
    %132 = vmatprep.subr.mxu0 0.0
    %133 = vmatpush1.msra.mxu0 %v100
    %134 = vmatprep.subr.mxu0 0.0
    %135 = vmatpush1.msra.mxu0 %v99
    %136 = vmatprep.subr.mxu0 0.0
    %137 = vmatpush1.msra.mxu0 %v98
    %138 = vmatprep.subr.mxu0 0.0
    %139 = vmatpush1.msra.mxu0 %v97
    %140 = vmatprep.subr.mxu0 0.0
    %141 = vmatpush1.msra.mxu0 %v96
    %142 = vmatprep.subr.mxu0 0.0
    %143 = vmatpush1.msra.mxu0 %v95
    %144 = vmatprep.subr.mxu0 0.0
    %145 = vmatpush1.msra.mxu0 %v94
    %146 = vmatprep.subr.mxu0 0.0
    %147 = vmatpush1.msra.mxu0 %v93
    %148 = vmatprep.subr.mxu0 0.0
    %149 = vmatpush2.msra.mxu0 0.0
    %150 = vmatprep.subr.mxu0 0.0
    %151 = vmatpush2.msra.mxu0 0.0
    %152 = vmatprep.subr.mxu0 0.0
    %153 = vmatpush2.msra.mxu0 0.0
    %154 = vmatprep.subr.mxu0 0.0
    %155 = vmatpush2.msra.mxu0 0.0
    %156 = vmatprep.subr.mxu0 0.0
    %157 = vmatpush2.msra.mxu0 0.0
    %158 = vmatprep.subr.mxu0 0.0
    %159 = vmatpush2.msra.mxu0 0.0
    %160 = vmatprep.subr.mxu0 0.0
    %161 = vmatpush2.msra.mxu0 0.0
    %162 = vmatprep.subr.mxu0 0.0
    %163 = vmatpush2.msra.mxu0 0.0
    %164 = vmatprep.subr.mxu0 0.0
    %165 = vmatpush2.msra.mxu0 0.0
    %166 = vmatprep.subr.mxu0 0.0
    %167 = vmatpush2.msra.mxu0 0.0
    %168 = vmatprep.subr.mxu0 0.0
    %169 = vmatpush2.msra.mxu0 0.0
    %170 = vmatprep.subr.mxu0 0.0
    %171 = vmatpush2.msra.mxu0 0.0
    %172 = vmatprep.subr.mxu0 0.0
    %173 = vmatpush2.msra.mxu0 0.0
    %174 = vmatprep.subr.mxu0 0.0
    %175 = vmatpush2.msra.mxu0 0.0
    %176 = vmatprep.subr.mxu0 0.0
    %177 = vmatpush2.msra.mxu0 0.0
    %178 = vmatprep.subr.mxu0 0.0
    %179 = vmatpush2.msra.mxu0 0.0
    %180 = vmatprep.mubr.f32.mxu0 0.0
    %181 = vmatmul.mubr.f32.gmra.mxu0 %v85
    %v182 = vpop.f32.mrf.mxu0
    %v183 = vadd.f32 %v114, %v182
    %v184 = vpop.f32.mrf.mxu0
    %185 = vmatprep.mubr.f32.mxu0 0.0
    %186 = vmatmul.mubr.f32.gmra.mxu0 %v86
    %v187 = vpop.f32.mrf.mxu0
    %v188 = vadd.f32 %v114, %v187
    %v189 = vpop.f32.mrf.mxu0
    %190 = vmatprep.mubr.f32.mxu0 0.0
    %191 = vmatmul.mubr.f32.gmra.mxu0 %v87
    %v192 = vpop.f32.mrf.mxu0
    %v193 = vadd.f32 %v114, %v192
    %v194 = vpop.f32.mrf.mxu0
    %195 = vmatprep.mubr.f32.mxu0 0.0
    %196 = vmatmul.mubr.f32.gmra.mxu0 %v88
    %v197 = vpop.f32.mrf.mxu0
    %v198 = vadd.f32 %v114, %v197
    %v199 = vpop.f32.mrf.mxu0
    %200 = vmatprep.mubr.f32.mxu0 0.0
    %201 = vmatmul.mubr.f32.gmra.mxu0 %v89
    %v202 = vpop.f32.mrf.mxu0
    %v203 = vadd.f32 %v114, %v202
    %v204 = vpop.f32.mrf.mxu0
    %205 = vmatprep.mubr.f32.mxu0 0.0
    %206 = vmatmul.mubr.f32.gmra.mxu0 %v90
    %v207 = vpop.f32.mrf.mxu0
    %v208 = vadd.f32 %v114, %v207
    %v209 = vpop.f32.mrf.mxu0
    %210 = vmatprep.mubr.f32.mxu0 0.0
    %211 = vmatmul.mubr.f32.gmra.mxu0 %v91
    %v212 = vpop.f32.mrf.mxu0
    %v213 = vadd.f32 %v114, %v212
    %v214 = vpop.f32.mrf.mxu0
    %215 = vmatprep.mubr.f32.mxu0 0.0
    %216 = vmatmul.mubr.f32.gmra.mxu0 %v92
    %v217 = vpop.f32.mrf.mxu0
    %v218 = vadd.f32 %v114, %v217
    %v219 = vpop.f32.mrf.mxu0
    %220 = vdwg.mxu0
    %v221 = vld [vmem:[#allocation9] sm:$0xff]
    %v222 = vld [vmem:[#allocation9 + $0x8] sm:$0xff]
    %v223 = vld [vmem:[#allocation9 + $0x10] sm:$0xff]
    %v224 = vld [vmem:[#allocation9 + $0x18] sm:$0xff]
    %v225 = vld [vmem:[#allocation9 + $0x20] sm:$0xff]
    %v226 = vld [vmem:[#allocation9 + $0x28] sm:$0xff]
    %v227 = vld [vmem:[#allocation9 + $0x30] sm:$0xff]
    %v228 = vld [vmem:[#allocation9 + $0x38] sm:$0xff]
    %v229 = vld [vmem:[#allocation9 + $0x40] sm:$0xff]
    %v230 = vld [vmem:[#allocation9 + $0x48] sm:$0xff]
    %v231 = vld [vmem:[#allocation9 + $0x50] sm:$0xff]
    %v232 = vld [vmem:[#allocation9 + $0x58] sm:$0xff]
    %v233 = vld [vmem:[#allocation9 + $0x60] sm:$0xff]
    %v234 = vld [vmem:[#allocation9 + $0x68] sm:$0xff]
    %v235 = vld [vmem:[#allocation9 + $0x70] sm:$0xff]
    %v236 = vld [vmem:[#allocation9 + $0x78] sm:$0xff]
    %v237 = vld [vmem:[#allocation10] sm:$0xff]
    %v238 = vld [vmem:[#allocation10 + $0x8] sm:$0xff]
    %v239 = vld [vmem:[#allocation10 + $0x10] sm:$0xff]
    %v240 = vld [vmem:[#allocation10 + $0x18] sm:$0xff]
    %v241 = vld [vmem:[#allocation10 + $0x20] sm:$0xff]
    %v242 = vld [vmem:[#allocation10 + $0x28] sm:$0xff]
    %v243 = vld [vmem:[#allocation10 + $0x30] sm:$0xff]
    %v244 = vld [vmem:[#allocation10 + $0x38] sm:$0xff]
    %v245 = vld [vmem:[#allocation10 + $0x40] sm:$0xff]
    %v246 = vld [vmem:[#allocation10 + $0x48] sm:$0xff]
    %v247 = vld [vmem:[#allocation10 + $0x50] sm:$0xff]
    %v248 = vld [vmem:[#allocation10 + $0x58] sm:$0xff]
    %v249 = vld [vmem:[#allocation10 + $0x60] sm:$0xff]
    %v250 = vld [vmem:[#allocation10 + $0x68] sm:$0xff]
    %v251 = vld [vmem:[#allocation10 + $0x70] sm:$0xff]
    %v252 = vld [vmem:[#allocation10 + $0x78] sm:$0xff]
    %v253 = vld [vmem:[%s5] sm:$0x1]
    %v254 = vld [vmem:[#allocation2] sm:$0xff]
    %v255 = vld [vmem:[#allocation3] sm:$0xff]
    %256 = vmatprep.subr.mxu0 0.0
    %257 = vmatpush1.msra.mxu0 %v236
    %258 = vmatprep.subr.mxu0 0.0
    %259 = vmatpush1.msra.mxu0 %v235
    %260 = vmatprep.subr.mxu0 0.0
    %261 = vmatpush1.msra.mxu0 %v234
    %262 = vmatprep.subr.mxu0 0.0
    %263 = vmatpush1.msra.mxu0 %v233
    %264 = vmatprep.subr.mxu0 0.0
    %265 = vmatpush1.msra.mxu0 %v232
    %266 = vmatprep.subr.mxu0 0.0
    %267 = vmatpush1.msra.mxu0 %v231
    %268 = vmatprep.subr.mxu0 0.0
    %269 = vmatpush1.msra.mxu0 %v230
    %270 = vmatprep.subr.mxu0 0.0
    %271 = vmatpush1.msra.mxu0 %v229
    %272 = vmatprep.subr.mxu0 0.0
    %273 = vmatpush1.msra.mxu0 %v228
    %274 = vmatprep.subr.mxu0 0.0
    %275 = vmatpush1.msra.mxu0 %v227
    %276 = vmatprep.subr.mxu0 0.0
    %277 = vmatpush1.msra.mxu0 %v226
    %278 = vmatprep.subr.mxu0 0.0
    %279 = vmatpush1.msra.mxu0 %v225
    %280 = vmatprep.subr.mxu0 0.0
    %281 = vmatpush1.msra.mxu0 %v224
    %282 = vmatprep.subr.mxu0 0.0
    %283 = vmatpush1.msra.mxu0 %v223
    %284 = vmatprep.subr.mxu0 0.0
    %285 = vmatpush1.msra.mxu0 %v222
    %286 = vmatprep.subr.mxu0 0.0
    %287 = vmatpush1.msra.mxu0 %v221
    %288 = vmatprep.subr.mxu0 0.0
    %289 = vmatpush2.msra.mxu0 0.0
    %290 = vmatprep.subr.mxu0 0.0
    %291 = vmatpush2.msra.mxu0 0.0
    %292 = vmatprep.subr.mxu0 0.0
    %293 = vmatpush2.msra.mxu0 0.0
    %294 = vmatprep.subr.mxu0 0.0
    %295 = vmatpush2.msra.mxu0 0.0
    %296 = vmatprep.subr.mxu0 0.0
    %297 = vmatpush2.msra.mxu0 0.0
    %298 = vmatprep.subr.mxu0 0.0
    %299 = vmatpush2.msra.mxu0 0.0
    %300 = vmatprep.subr.mxu0 0.0
    %301 = vmatpush2.msra.mxu0 0.0
    %302 = vmatprep.subr.mxu0 0.0
    %303 = vmatpush2.msra.mxu0 0.0
    %304 = vmatprep.subr.mxu0 0.0
    %305 = vmatpush2.msra.mxu0 0.0
    %306 = vmatprep.subr.mxu0 0.0
    %307 = vmatpush2.msra.mxu0 0.0
    %308 = vmatprep.subr.mxu0 0.0
    %309 = vmatpush2.msra.mxu0 0.0
    %310 = vmatprep.subr.mxu0 0.0
    %311 = vmatpush2.msra.mxu0 0.0
    %312 = vmatprep.subr.mxu0 0.0
    %313 = vmatpush2.msra.mxu0 0.0
    %314 = vmatprep.subr.mxu0 0.0
    %315 = vmatpush2.msra.mxu0 0.0
    %316 = vmatprep.subr.mxu0 0.0
    %317 = vmatpush2.msra.mxu0 0.0
    %318 = vmatprep.subr.mxu0 0.0
    %319 = vmatpush2.msra.mxu0 0.0
    %320 = vmatprep.mubr.f32.mxu0 0.0
    %321 = vmatmul.mubr.f32.gmra.mxu0 %v254
    %v322 = vpop.f32.mrf.mxu0
    %v323 = vadd.f32 %v183, %v322
    %v324 = vpop.f32.mrf.mxu0
    %325 = vdwg.mxu0
    %v326 = vmax.f32 %v323, 0.0
    %v328 = vlaneseq
    %v329 = vshrl.u32 %v328, 7
    %v330 = vsub.s32 0, %v329
    %v331 = vrot.slane %v253, %v330
    %333 = vmatprep.subr.mxu0 0.0
    %334 = vmatpush1.msra.mxu0 %v252
    %335 = vmatprep.subr.mxu0 0.0
    %336 = vmatpush1.msra.mxu0 %v251
    %337 = vmatprep.subr.mxu0 0.0
    %338 = vmatpush1.msra.mxu0 %v250
    %339 = vmatprep.subr.mxu0 0.0
    %340 = vmatpush1.msra.mxu0 %v249
    %341 = vmatprep.subr.mxu0 0.0
    %342 = vmatpush1.msra.mxu0 %v248
    %343 = vmatprep.subr.mxu0 0.0
    %344 = vmatpush1.msra.mxu0 %v247
    %345 = vmatprep.subr.mxu0 0.0
    %346 = vmatpush1.msra.mxu0 %v246
    %347 = vmatprep.subr.mxu0 0.0
    %348 = vmatpush1.msra.mxu0 %v245
    %349 = vmatprep.subr.mxu0 0.0
    %350 = vmatpush1.msra.mxu0 %v244
    %351 = vmatprep.subr.mxu0 0.0
    %352 = vmatpush1.msra.mxu0 %v243
    %353 = vmatprep.subr.mxu0 0.0
    %354 = vmatpush1.msra.mxu0 %v242
    %355 = vmatprep.subr.mxu0 0.0
    %356 = vmatpush1.msra.mxu0 %v241
    %357 = vmatprep.subr.mxu0 0.0
    %358 = vmatpush1.msra.mxu0 %v240
    %359 = vmatprep.subr.mxu0 0.0
    %360 = vmatpush1.msra.mxu0 %v239
    %361 = vmatprep.subr.mxu0 0.0
    %362 = vmatpush1.msra.mxu0 %v238
    %363 = vmatprep.subr.mxu0 0.0
    %364 = vmatpush1.msra.mxu0 %v237
    %365 = vmatprep.subr.mxu0 0.0
    %366 = vmatpush2.msra.mxu0 0.0
    %367 = vmatprep.subr.mxu0 0.0
    %368 = vmatpush2.msra.mxu0 0.0
    %369 = vmatprep.subr.mxu0 0.0
    %370 = vmatpush2.msra.mxu0 0.0
    %371 = vmatprep.subr.mxu0 0.0
    %372 = vmatpush2.msra.mxu0 0.0
    %373 = vmatprep.subr.mxu0 0.0
    %374 = vmatpush2.msra.mxu0 0.0
    %375 = vmatprep.subr.mxu0 0.0
    %376 = vmatpush2.msra.mxu0 0.0
    %377 = vmatprep.subr.mxu0 0.0
    %378 = vmatpush2.msra.mxu0 0.0
    %379 = vmatprep.subr.mxu0 0.0
    %380 = vmatpush2.msra.mxu0 0.0
    %381 = vmatprep.subr.mxu0 0.0
    %382 = vmatpush2.msra.mxu0 0.0
    %383 = vmatprep.subr.mxu0 0.0
    %384 = vmatpush2.msra.mxu0 0.0
    %385 = vmatprep.subr.mxu0 0.0
    %386 = vmatpush2.msra.mxu0 0.0
    %387 = vmatprep.subr.mxu0 0.0
    %388 = vmatpush2.msra.mxu0 0.0
    %389 = vmatprep.subr.mxu0 0.0
    %390 = vmatpush2.msra.mxu0 0.0
    %391 = vmatprep.subr.mxu0 0.0
    %392 = vmatpush2.msra.mxu0 0.0
    %393 = vmatprep.subr.mxu0 0.0
    %394 = vmatpush2.msra.mxu0 0.0
    %395 = vmatprep.subr.mxu0 0.0
    %396 = vmatpush2.msra.mxu0 0.0
    %397 = vmatprep.mubr.f32.mxu0 0.0
    %398 = vmatmul.mubr.f32.gmra.mxu0 %v326
    %v399 = vpop.f32.mrf.mxu0
    %v400 = vadd.f32 %v331, %v399
    %v401 = vpop.f32.mrf.mxu0
    %402 = vdwg.mxu0
    %v403 = vmax.f32 %v255, %v400
    %404 = vmatprep.subr.mxu0 0.0
    %405 = vmatpush1.msra.mxu0 %v236
    %406 = vmatprep.subr.mxu0 0.0
    %407 = vmatpush1.msra.mxu0 %v235
    %408 = vmatprep.subr.mxu0 0.0
    %409 = vmatpush1.msra.mxu0 %v234
    %410 = vmatprep.subr.mxu0 0.0
    %411 = vmatpush1.msra.mxu0 %v233
    %412 = vmatprep.subr.mxu0 0.0
    %413 = vmatpush1.msra.mxu0 %v232
    %414 = vmatprep.subr.mxu0 0.0
    %415 = vmatpush1.msra.mxu0 %v231
    %416 = vmatprep.subr.mxu0 0.0
    %417 = vmatpush1.msra.mxu0 %v230
    %418 = vmatprep.subr.mxu0 0.0
    %419 = vmatpush1.msra.mxu0 %v229
    %420 = vmatprep.subr.mxu0 0.0
    %421 = vmatpush1.msra.mxu0 %v228
    %422 = vmatprep.subr.mxu0 0.0
    %423 = vmatpush1.msra.mxu0 %v227
    %424 = vmatprep.subr.mxu0 0.0
    %425 = vmatpush1.msra.mxu0 %v226
    %426 = vmatprep.subr.mxu0 0.0
    %427 = vmatpush1.msra.mxu0 %v225
    %428 = vmatprep.subr.mxu0 0.0
    %429 = vmatpush1.msra.mxu0 %v224
    %430 = vmatprep.subr.mxu0 0.0
    %431 = vmatpush1.msra.mxu0 %v223
    %432 = vmatprep.subr.mxu0 0.0
    %433 = vmatpush1.msra.mxu0 %v222
    %434 = vmatprep.subr.mxu0 0.0
    %435 = vmatpush1.msra.mxu0 %v221
    %436 = vmatprep.subr.mxu0 0.0
    %437 = vmatpush2.msra.mxu0 0.0
    %438 = vmatprep.subr.mxu0 0.0
    %439 = vmatpush2.msra.mxu0 0.0
    %440 = vmatprep.subr.mxu0 0.0
    %441 = vmatpush2.msra.mxu0 0.0
    %442 = vmatprep.subr.mxu0 0.0
    %443 = vmatpush2.msra.mxu0 0.0
    %444 = vmatprep.subr.mxu0 0.0
    %445 = vmatpush2.msra.mxu0 0.0
    %446 = vmatprep.subr.mxu0 0.0
    %447 = vmatpush2.msra.mxu0 0.0
    %448 = vmatprep.subr.mxu0 0.0
    %449 = vmatpush2.msra.mxu0 0.0
    %450 = vmatprep.subr.mxu0 0.0
    %451 = vmatpush2.msra.mxu0 0.0
    %452 = vmatprep.subr.mxu0 0.0
    %453 = vmatpush2.msra.mxu0 0.0
    %454 = vmatprep.subr.mxu0 0.0
    %455 = vmatpush2.msra.mxu0 0.0
    %456 = vmatprep.subr.mxu0 0.0
    %457 = vmatpush2.msra.mxu0 0.0
    %458 = vmatprep.subr.mxu0 0.0
    %459 = vmatpush2.msra.mxu0 0.0
    %460 = vmatprep.subr.mxu0 0.0
    %461 = vmatpush2.msra.mxu0 0.0
    %462 = vmatprep.subr.mxu0 0.0
    %463 = vmatpush2.msra.mxu0 0.0
    %464 = vmatprep.subr.mxu0 0.0
    %465 = vmatpush2.msra.mxu0 0.0
    %466 = vmatprep.subr.mxu0 0.0
    %467 = vmatpush2.msra.mxu0 0.0
    %468 = vmatprep.mubr.f32.mxu0 0.0
    %469 = vmatmul.mubr.f32.gmra.mxu0 %v326
    %v470 = vpop.f32.mrf.mxu0
    %v471 = vadd.f32 %v188, %v470
    %v472 = vpop.f32.mrf.mxu0
    %473 = vdwg.mxu0
    %v474 = vmax.f32 %v471, 0.0
    %475 = vmatprep.subr.mxu0 0.0
    %476 = vmatpush1.msra.mxu0 %v252
    %477 = vmatprep.subr.mxu0 0.0
    %478 = vmatpush1.msra.mxu0 %v251
    %479 = vmatprep.subr.mxu0 0.0
    %480 = vmatpush1.msra.mxu0 %v250
    %481 = vmatprep.subr.mxu0 0.0
    %482 = vmatpush1.msra.mxu0 %v249
    %483 = vmatprep.subr.mxu0 0.0
    %484 = vmatpush1.msra.mxu0 %v248
    %485 = vmatprep.subr.mxu0 0.0
    %486 = vmatpush1.msra.mxu0 %v247
    %487 = vmatprep.subr.mxu0 0.0
    %488 = vmatpush1.msra.mxu0 %v246
    %489 = vmatprep.subr.mxu0 0.0
    %490 = vmatpush1.msra.mxu0 %v245
    %491 = vmatprep.subr.mxu0 0.0
    %492 = vmatpush1.msra.mxu0 %v244
    %493 = vmatprep.subr.mxu0 0.0
    %494 = vmatpush1.msra.mxu0 %v243
    %495 = vmatprep.subr.mxu0 0.0
    %496 = vmatpush1.msra.mxu0 %v242
    %497 = vmatprep.subr.mxu0 0.0
    %498 = vmatpush1.msra.mxu0 %v241
    %499 = vmatprep.subr.mxu0 0.0
    %500 = vmatpush1.msra.mxu0 %v240
    %501 = vmatprep.subr.mxu0 0.0
    %502 = vmatpush1.msra.mxu0 %v239
    %503 = vmatprep.subr.mxu0 0.0
    %504 = vmatpush1.msra.mxu0 %v238
    %505 = vmatprep.subr.mxu0 0.0
    %506 = vmatpush1.msra.mxu0 %v237
    %507 = vmatprep.subr.mxu0 0.0
    %508 = vmatpush2.msra.mxu0 0.0
    %509 = vmatprep.subr.mxu0 0.0
    %510 = vmatpush2.msra.mxu0 0.0
    %511 = vmatprep.subr.mxu0 0.0
    %512 = vmatpush2.msra.mxu0 0.0
    %513 = vmatprep.subr.mxu0 0.0
    %514 = vmatpush2.msra.mxu0 0.0
    %515 = vmatprep.subr.mxu0 0.0
    %516 = vmatpush2.msra.mxu0 0.0
    %517 = vmatprep.subr.mxu0 0.0
    %518 = vmatpush2.msra.mxu0 0.0
    %519 = vmatprep.subr.mxu0 0.0
    %520 = vmatpush2.msra.mxu0 0.0
    %521 = vmatprep.subr.mxu0 0.0
    %522 = vmatpush2.msra.mxu0 0.0
    %523 = vmatprep.subr.mxu0 0.0
    %524 = vmatpush2.msra.mxu0 0.0
    %525 = vmatprep.subr.mxu0 0.0
    %526 = vmatpush2.msra.mxu0 0.0
    %527 = vmatprep.subr.mxu0 0.0
    %528 = vmatpush2.msra.mxu0 0.0
    %529 = vmatprep.subr.mxu0 0.0
    %530 = vmatpush2.msra.mxu0 0.0
    %531 = vmatprep.subr.mxu0 0.0
    %532 = vmatpush2.msra.mxu0 0.0
    %533 = vmatprep.subr.mxu0 0.0
    %534 = vmatpush2.msra.mxu0 0.0
    %535 = vmatprep.subr.mxu0 0.0
    %536 = vmatpush2.msra.mxu0 0.0
    %537 = vmatprep.subr.mxu0 0.0
    %538 = vmatpush2.msra.mxu0 0.0
    %539 = vmatprep.mubr.f32.mxu0 0.0
    %540 = vmatmul.mubr.f32.gmra.mxu0 %v474
    %v541 = vpop.f32.mrf.mxu0
    %v542 = vadd.f32 %v331, %v541
    %v543 = vpop.f32.mrf.mxu0
    %544 = vdwg.mxu0
    %v545 = vmax.f32 %v403, %v542
    %546 = vmatprep.subr.mxu0 0.0
    %547 = vmatpush1.msra.mxu0 %v236
    %548 = vmatprep.subr.mxu0 0.0
    %549 = vmatpush1.msra.mxu0 %v235
    %550 = vmatprep.subr.mxu0 0.0
    %551 = vmatpush1.msra.mxu0 %v234
    %552 = vmatprep.subr.mxu0 0.0
    %553 = vmatpush1.msra.mxu0 %v233
    %554 = vmatprep.subr.mxu0 0.0
    %555 = vmatpush1.msra.mxu0 %v232
    %556 = vmatprep.subr.mxu0 0.0
    %557 = vmatpush1.msra.mxu0 %v231
    %558 = vmatprep.subr.mxu0 0.0
    %559 = vmatpush1.msra.mxu0 %v230
    %560 = vmatprep.subr.mxu0 0.0
    %561 = vmatpush1.msra.mxu0 %v229
    %562 = vmatprep.subr.mxu0 0.0
    %563 = vmatpush1.msra.mxu0 %v228
    %564 = vmatprep.subr.mxu0 0.0
    %565 = vmatpush1.msra.mxu0 %v227
    %566 = vmatprep.subr.mxu0 0.0
    %567 = vmatpush1.msra.mxu0 %v226
    %568 = vmatprep.subr.mxu0 0.0
    %569 = vmatpush1.msra.mxu0 %v225
    %570 = vmatprep.subr.mxu0 0.0
    %571 = vmatpush1.msra.mxu0 %v224
    %572 = vmatprep.subr.mxu0 0.0
    %573 = vmatpush1.msra.mxu0 %v223
    %574 = vmatprep.subr.mxu0 0.0
    %575 = vmatpush1.msra.mxu0 %v222
    %576 = vmatprep.subr.mxu0 0.0
    %577 = vmatpush1.msra.mxu0 %v221
    %578 = vmatprep.subr.mxu0 0.0
    %579 = vmatpush2.msra.mxu0 0.0
    %580 = vmatprep.subr.mxu0 0.0
    %581 = vmatpush2.msra.mxu0 0.0
    %582 = vmatprep.subr.mxu0 0.0
    %583 = vmatpush2.msra.mxu0 0.0
    %584 = vmatprep.subr.mxu0 0.0
    %585 = vmatpush2.msra.mxu0 0.0
    %586 = vmatprep.subr.mxu0 0.0
    %587 = vmatpush2.msra.mxu0 0.0
    %588 = vmatprep.subr.mxu0 0.0
    %589 = vmatpush2.msra.mxu0 0.0
    %590 = vmatprep.subr.mxu0 0.0
    %591 = vmatpush2.msra.mxu0 0.0
    %592 = vmatprep.subr.mxu0 0.0
    %593 = vmatpush2.msra.mxu0 0.0
    %594 = vmatprep.subr.mxu0 0.0
    %595 = vmatpush2.msra.mxu0 0.0
    %596 = vmatprep.subr.mxu0 0.0
    %597 = vmatpush2.msra.mxu0 0.0
    %598 = vmatprep.subr.mxu0 0.0
    %599 = vmatpush2.msra.mxu0 0.0
    %600 = vmatprep.subr.mxu0 0.0
    %601 = vmatpush2.msra.mxu0 0.0
    %602 = vmatprep.subr.mxu0 0.0
    %603 = vmatpush2.msra.mxu0 0.0
    %604 = vmatprep.subr.mxu0 0.0
    %605 = vmatpush2.msra.mxu0 0.0
    %606 = vmatprep.subr.mxu0 0.0
    %607 = vmatpush2.msra.mxu0 0.0
    %608 = vmatprep.subr.mxu0 0.0
    %609 = vmatpush2.msra.mxu0 0.0
    %610 = vmatprep.mubr.f32.mxu0 0.0
    %611 = vmatmul.mubr.f32.gmra.mxu0 %v474
    %v612 = vpop.f32.mrf.mxu0
    %v613 = vadd.f32 %v193, %v612
    %v614 = vpop.f32.mrf.mxu0
    %615 = vdwg.mxu0
    %v616 = vmax.f32 %v613, 0.0
    %617 = vmatprep.subr.mxu0 0.0
    %618 = vmatpush1.msra.mxu0 %v252
    %619 = vmatprep.subr.mxu0 0.0
    %620 = vmatpush1.msra.mxu0 %v251
    %621 = vmatprep.subr.mxu0 0.0
    %622 = vmatpush1.msra.mxu0 %v250
    %623 = vmatprep.subr.mxu0 0.0
    %624 = vmatpush1.msra.mxu0 %v249
    %625 = vmatprep.subr.mxu0 0.0
    %626 = vmatpush1.msra.mxu0 %v248
    %627 = vmatprep.subr.mxu0 0.0
    %628 = vmatpush1.msra.mxu0 %v247
    %629 = vmatprep.subr.mxu0 0.0
    %630 = vmatpush1.msra.mxu0 %v246
    %631 = vmatprep.subr.mxu0 0.0
    %632 = vmatpush1.msra.mxu0 %v245
    %633 = vmatprep.subr.mxu0 0.0
    %634 = vmatpush1.msra.mxu0 %v244
    %635 = vmatprep.subr.mxu0 0.0
    %636 = vmatpush1.msra.mxu0 %v243
    %637 = vmatprep.subr.mxu0 0.0
    %638 = vmatpush1.msra.mxu0 %v242
    %639 = vmatprep.subr.mxu0 0.0
    %640 = vmatpush1.msra.mxu0 %v241
    %641 = vmatprep.subr.mxu0 0.0
    %642 = vmatpush1.msra.mxu0 %v240
    %643 = vmatprep.subr.mxu0 0.0
    %644 = vmatpush1.msra.mxu0 %v239
    %645 = vmatprep.subr.mxu0 0.0
    %646 = vmatpush1.msra.mxu0 %v238
    %647 = vmatprep.subr.mxu0 0.0
    %648 = vmatpush1.msra.mxu0 %v237
    %649 = vmatprep.subr.mxu0 0.0
    %650 = vmatpush2.msra.mxu0 0.0
    %651 = vmatprep.subr.mxu0 0.0
    %652 = vmatpush2.msra.mxu0 0.0
    %653 = vmatprep.subr.mxu0 0.0
    %654 = vmatpush2.msra.mxu0 0.0
    %655 = vmatprep.subr.mxu0 0.0
    %656 = vmatpush2.msra.mxu0 0.0
    %657 = vmatprep.subr.mxu0 0.0
    %658 = vmatpush2.msra.mxu0 0.0
    %659 = vmatprep.subr.mxu0 0.0
    %660 = vmatpush2.msra.mxu0 0.0
    %661 = vmatprep.subr.mxu0 0.0
    %662 = vmatpush2.msra.mxu0 0.0
    %663 = vmatprep.subr.mxu0 0.0
    %664 = vmatpush2.msra.mxu0 0.0
    %665 = vmatprep.subr.mxu0 0.0
    %666 = vmatpush2.msra.mxu0 0.0
    %667 = vmatprep.subr.mxu0 0.0
    %668 = vmatpush2.msra.mxu0 0.0
    %669 = vmatprep.subr.mxu0 0.0
    %670 = vmatpush2.msra.mxu0 0.0
    %671 = vmatprep.subr.mxu0 0.0
    %672 = vmatpush2.msra.mxu0 0.0
    %673 = vmatprep.subr.mxu0 0.0
    %674 = vmatpush2.msra.mxu0 0.0
    %675 = vmatprep.subr.mxu0 0.0
    %676 = vmatpush2.msra.mxu0 0.0
    %677 = vmatprep.subr.mxu0 0.0
    %678 = vmatpush2.msra.mxu0 0.0
    %679 = vmatprep.subr.mxu0 0.0
    %680 = vmatpush2.msra.mxu0 0.0
    %681 = vmatprep.mubr.f32.mxu0 0.0
    %682 = vmatmul.mubr.f32.gmra.mxu0 %v616
    %v683 = vpop.f32.mrf.mxu0
    %v684 = vadd.f32 %v331, %v683
    %v685 = vpop.f32.mrf.mxu0
    %686 = vdwg.mxu0
    %v687 = vmax.f32 %v545, %v684
    %688 = vmatprep.subr.mxu0 0.0
    %689 = vmatpush1.msra.mxu0 %v236
    %690 = vmatprep.subr.mxu0 0.0
    %691 = vmatpush1.msra.mxu0 %v235
    %692 = vmatprep.subr.mxu0 0.0
    %693 = vmatpush1.msra.mxu0 %v234
    %694 = vmatprep.subr.mxu0 0.0
    %695 = vmatpush1.msra.mxu0 %v233
    %696 = vmatprep.subr.mxu0 0.0
    %697 = vmatpush1.msra.mxu0 %v232
    %698 = vmatprep.subr.mxu0 0.0
    %699 = vmatpush1.msra.mxu0 %v231
    %700 = vmatprep.subr.mxu0 0.0
    %701 = vmatpush1.msra.mxu0 %v230
    %702 = vmatprep.subr.mxu0 0.0
    %703 = vmatpush1.msra.mxu0 %v229
    %704 = vmatprep.subr.mxu0 0.0
    %705 = vmatpush1.msra.mxu0 %v228
    %706 = vmatprep.subr.mxu0 0.0
    %707 = vmatpush1.msra.mxu0 %v227
    %708 = vmatprep.subr.mxu0 0.0
    %709 = vmatpush1.msra.mxu0 %v226
    %710 = vmatprep.subr.mxu0 0.0
    %711 = vmatpush1.msra.mxu0 %v225
    %712 = vmatprep.subr.mxu0 0.0
    %713 = vmatpush1.msra.mxu0 %v224
    %714 = vmatprep.subr.mxu0 0.0
    %715 = vmatpush1.msra.mxu0 %v223
    %716 = vmatprep.subr.mxu0 0.0
    %717 = vmatpush1.msra.mxu0 %v222
    %718 = vmatprep.subr.mxu0 0.0
    %719 = vmatpush1.msra.mxu0 %v221
    %720 = vmatprep.subr.mxu0 0.0
    %721 = vmatpush2.msra.mxu0 0.0
    %722 = vmatprep.subr.mxu0 0.0
    %723 = vmatpush2.msra.mxu0 0.0
    %724 = vmatprep.subr.mxu0 0.0
    %725 = vmatpush2.msra.mxu0 0.0
    %726 = vmatprep.subr.mxu0 0.0
    %727 = vmatpush2.msra.mxu0 0.0
    %728 = vmatprep.subr.mxu0 0.0
    %729 = vmatpush2.msra.mxu0 0.0
    %730 = vmatprep.subr.mxu0 0.0
    %731 = vmatpush2.msra.mxu0 0.0
    %732 = vmatprep.subr.mxu0 0.0
    %733 = vmatpush2.msra.mxu0 0.0
    %734 = vmatprep.subr.mxu0 0.0
    %735 = vmatpush2.msra.mxu0 0.0
    %736 = vmatprep.subr.mxu0 0.0
    %737 = vmatpush2.msra.mxu0 0.0
    %738 = vmatprep.subr.mxu0 0.0
    %739 = vmatpush2.msra.mxu0 0.0
    %740 = vmatprep.subr.mxu0 0.0
    %741 = vmatpush2.msra.mxu0 0.0
    %742 = vmatprep.subr.mxu0 0.0
    %743 = vmatpush2.msra.mxu0 0.0
    %744 = vmatprep.subr.mxu0 0.0
    %745 = vmatpush2.msra.mxu0 0.0
    %746 = vmatprep.subr.mxu0 0.0
    %747 = vmatpush2.msra.mxu0 0.0
    %748 = vmatprep.subr.mxu0 0.0
    %749 = vmatpush2.msra.mxu0 0.0
    %750 = vmatprep.subr.mxu0 0.0
    %751 = vmatpush2.msra.mxu0 0.0
    %752 = vmatprep.mubr.f32.mxu0 0.0
    %753 = vmatmul.mubr.f32.gmra.mxu0 %v616
    %v754 = vpop.f32.mrf.mxu0
    %v755 = vadd.f32 %v198, %v754
    %v756 = vpop.f32.mrf.mxu0
    %757 = vdwg.mxu0
    %v758 = vmax.f32 %v755, 0.0
    %759 = vmatprep.subr.mxu0 0.0
    %760 = vmatpush1.msra.mxu0 %v252
    %761 = vmatprep.subr.mxu0 0.0
    %762 = vmatpush1.msra.mxu0 %v251
    %763 = vmatprep.subr.mxu0 0.0
    %764 = vmatpush1.msra.mxu0 %v250
    %765 = vmatprep.subr.mxu0 0.0
    %766 = vmatpush1.msra.mxu0 %v249
    %767 = vmatprep.subr.mxu0 0.0
    %768 = vmatpush1.msra.mxu0 %v248
    %769 = vmatprep.subr.mxu0 0.0
    %770 = vmatpush1.msra.mxu0 %v247
    %771 = vmatprep.subr.mxu0 0.0
    %772 = vmatpush1.msra.mxu0 %v246
    %773 = vmatprep.subr.mxu0 0.0
    %774 = vmatpush1.msra.mxu0 %v245
    %775 = vmatprep.subr.mxu0 0.0
    %776 = vmatpush1.msra.mxu0 %v244
    %777 = vmatprep.subr.mxu0 0.0
    %778 = vmatpush1.msra.mxu0 %v243
    %779 = vmatprep.subr.mxu0 0.0
    %780 = vmatpush1.msra.mxu0 %v242
    %781 = vmatprep.subr.mxu0 0.0
    %782 = vmatpush1.msra.mxu0 %v241
    %783 = vmatprep.subr.mxu0 0.0
    %784 = vmatpush1.msra.mxu0 %v240
    %785 = vmatprep.subr.mxu0 0.0
    %786 = vmatpush1.msra.mxu0 %v239
    %787 = vmatprep.subr.mxu0 0.0
    %788 = vmatpush1.msra.mxu0 %v238
    %789 = vmatprep.subr.mxu0 0.0
    %790 = vmatpush1.msra.mxu0 %v237
    %791 = vmatprep.subr.mxu0 0.0
    %792 = vmatpush2.msra.mxu0 0.0
    %793 = vmatprep.subr.mxu0 0.0
    %794 = vmatpush2.msra.mxu0 0.0
    %795 = vmatprep.subr.mxu0 0.0
    %796 = vmatpush2.msra.mxu0 0.0
    %797 = vmatprep.subr.mxu0 0.0
    %798 = vmatpush2.msra.mxu0 0.0
    %799 = vmatprep.subr.mxu0 0.0
    %800 = vmatpush2.msra.mxu0 0.0
    %801 = vmatprep.subr.mxu0 0.0
    %802 = vmatpush2.msra.mxu0 0.0
    %803 = vmatprep.subr.mxu0 0.0
    %804 = vmatpush2.msra.mxu0 0.0
    %805 = vmatprep.subr.mxu0 0.0
    %806 = vmatpush2.msra.mxu0 0.0
    %807 = vmatprep.subr.mxu0 0.0
    %808 = vmatpush2.msra.mxu0 0.0
    %809 = vmatprep.subr.mxu0 0.0
    %810 = vmatpush2.msra.mxu0 0.0
    %811 = vmatprep.subr.mxu0 0.0
    %812 = vmatpush2.msra.mxu0 0.0
    %813 = vmatprep.subr.mxu0 0.0
    %814 = vmatpush2.msra.mxu0 0.0
    %815 = vmatprep.subr.mxu0 0.0
    %816 = vmatpush2.msra.mxu0 0.0
    %817 = vmatprep.subr.mxu0 0.0
    %818 = vmatpush2.msra.mxu0 0.0
    %819 = vmatprep.subr.mxu0 0.0
    %820 = vmatpush2.msra.mxu0 0.0
    %821 = vmatprep.subr.mxu0 0.0
    %822 = vmatpush2.msra.mxu0 0.0
    %823 = vmatprep.mubr.f32.mxu0 0.0
    %824 = vmatmul.mubr.f32.gmra.mxu0 %v758
    %v825 = vpop.f32.mrf.mxu0
    %v826 = vadd.f32 %v331, %v825
    %v827 = vpop.f32.mrf.mxu0
    %828 = vdwg.mxu0
    %v829 = vmax.f32 %v687, %v826
    %830 = vmatprep.subr.mxu0 0.0
    %831 = vmatpush1.msra.mxu0 %v236
    %832 = vmatprep.subr.mxu0 0.0
    %833 = vmatpush1.msra.mxu0 %v235
    %834 = vmatprep.subr.mxu0 0.0
    %835 = vmatpush1.msra.mxu0 %v234
    %836 = vmatprep.subr.mxu0 0.0
    %837 = vmatpush1.msra.mxu0 %v233
    %838 = vmatprep.subr.mxu0 0.0
    %839 = vmatpush1.msra.mxu0 %v232
    %840 = vmatprep.subr.mxu0 0.0
    %841 = vmatpush1.msra.mxu0 %v231
    %842 = vmatprep.subr.mxu0 0.0
    %843 = vmatpush1.msra.mxu0 %v230
    %844 = vmatprep.subr.mxu0 0.0
    %845 = vmatpush1.msra.mxu0 %v229
    %846 = vmatprep.subr.mxu0 0.0
    %847 = vmatpush1.msra.mxu0 %v228
    %848 = vmatprep.subr.mxu0 0.0
    %849 = vmatpush1.msra.mxu0 %v227
    %850 = vmatprep.subr.mxu0 0.0
    %851 = vmatpush1.msra.mxu0 %v226
    %852 = vmatprep.subr.mxu0 0.0
    %853 = vmatpush1.msra.mxu0 %v225
    %854 = vmatprep.subr.mxu0 0.0
    %855 = vmatpush1.msra.mxu0 %v224
    %856 = vmatprep.subr.mxu0 0.0
    %857 = vmatpush1.msra.mxu0 %v223
    %858 = vmatprep.subr.mxu0 0.0
    %859 = vmatpush1.msra.mxu0 %v222
    %860 = vmatprep.subr.mxu0 0.0
    %861 = vmatpush1.msra.mxu0 %v221
    %862 = vmatprep.subr.mxu0 0.0
    %863 = vmatpush2.msra.mxu0 0.0
    %864 = vmatprep.subr.mxu0 0.0
    %865 = vmatpush2.msra.mxu0 0.0
    %866 = vmatprep.subr.mxu0 0.0
    %867 = vmatpush2.msra.mxu0 0.0
    %868 = vmatprep.subr.mxu0 0.0
    %869 = vmatpush2.msra.mxu0 0.0
    %870 = vmatprep.subr.mxu0 0.0
    %871 = vmatpush2.msra.mxu0 0.0
    %872 = vmatprep.subr.mxu0 0.0
    %873 = vmatpush2.msra.mxu0 0.0
    %874 = vmatprep.subr.mxu0 0.0
    %875 = vmatpush2.msra.mxu0 0.0
    %876 = vmatprep.subr.mxu0 0.0
    %877 = vmatpush2.msra.mxu0 0.0
    %878 = vmatprep.subr.mxu0 0.0
    %879 = vmatpush2.msra.mxu0 0.0
    %880 = vmatprep.subr.mxu0 0.0
    %881 = vmatpush2.msra.mxu0 0.0
    %882 = vmatprep.subr.mxu0 0.0
    %883 = vmatpush2.msra.mxu0 0.0
    %884 = vmatprep.subr.mxu0 0.0
    %885 = vmatpush2.msra.mxu0 0.0
    %886 = vmatprep.subr.mxu0 0.0
    %887 = vmatpush2.msra.mxu0 0.0
    %888 = vmatprep.subr.mxu0 0.0
    %889 = vmatpush2.msra.mxu0 0.0
    %890 = vmatprep.subr.mxu0 0.0
    %891 = vmatpush2.msra.mxu0 0.0
    %892 = vmatprep.subr.mxu0 0.0
    %893 = vmatpush2.msra.mxu0 0.0
    %894 = vmatprep.mubr.f32.mxu0 0.0
    %895 = vmatmul.mubr.f32.gmra.mxu0 %v758
    %v896 = vpop.f32.mrf.mxu0
    %v897 = vadd.f32 %v203, %v896
    %v898 = vpop.f32.mrf.mxu0
    %899 = vdwg.mxu0
    %v900 = vmax.f32 %v897, 0.0
    %901 = vmatprep.subr.mxu0 0.0
    %902 = vmatpush1.msra.mxu0 %v252
    %903 = vmatprep.subr.mxu0 0.0
    %904 = vmatpush1.msra.mxu0 %v251
    %905 = vmatprep.subr.mxu0 0.0
    %906 = vmatpush1.msra.mxu0 %v250
    %907 = vmatprep.subr.mxu0 0.0
    %908 = vmatpush1.msra.mxu0 %v249
    %909 = vmatprep.subr.mxu0 0.0
    %910 = vmatpush1.msra.mxu0 %v248
    %911 = vmatprep.subr.mxu0 0.0
    %912 = vmatpush1.msra.mxu0 %v247
    %913 = vmatprep.subr.mxu0 0.0
    %914 = vmatpush1.msra.mxu0 %v246
    %915 = vmatprep.subr.mxu0 0.0
    %916 = vmatpush1.msra.mxu0 %v245
    %917 = vmatprep.subr.mxu0 0.0
    %918 = vmatpush1.msra.mxu0 %v244
    %919 = vmatprep.subr.mxu0 0.0
    %920 = vmatpush1.msra.mxu0 %v243
    %921 = vmatprep.subr.mxu0 0.0
    %922 = vmatpush1.msra.mxu0 %v242
    %923 = vmatprep.subr.mxu0 0.0
    %924 = vmatpush1.msra.mxu0 %v241
    %925 = vmatprep.subr.mxu0 0.0
    %926 = vmatpush1.msra.mxu0 %v240
    %927 = vmatprep.subr.mxu0 0.0
    %928 = vmatpush1.msra.mxu0 %v239
    %929 = vmatprep.subr.mxu0 0.0
    %930 = vmatpush1.msra.mxu0 %v238
    %931 = vmatprep.subr.mxu0 0.0
    %932 = vmatpush1.msra.mxu0 %v237
    %933 = vmatprep.subr.mxu0 0.0
    %934 = vmatpush2.msra.mxu0 0.0
    %935 = vmatprep.subr.mxu0 0.0
    %936 = vmatpush2.msra.mxu0 0.0
    %937 = vmatprep.subr.mxu0 0.0
    %938 = vmatpush2.msra.mxu0 0.0
    %939 = vmatprep.subr.mxu0 0.0
    %940 = vmatpush2.msra.mxu0 0.0
    %941 = vmatprep.subr.mxu0 0.0
    %942 = vmatpush2.msra.mxu0 0.0
    %943 = vmatprep.subr.mxu0 0.0
    %944 = vmatpush2.msra.mxu0 0.0
    %945 = vmatprep.subr.mxu0 0.0
    %946 = vmatpush2.msra.mxu0 0.0
    %947 = vmatprep.subr.mxu0 0.0
    %948 = vmatpush2.msra.mxu0 0.0
    %949 = vmatprep.subr.mxu0 0.0
    %950 = vmatpush2.msra.mxu0 0.0
    %951 = vmatprep.subr.mxu0 0.0
    %952 = vmatpush2.msra.mxu0 0.0
    %953 = vmatprep.subr.mxu0 0.0
    %954 = vmatpush2.msra.mxu0 0.0
    %955 = vmatprep.subr.mxu0 0.0
    %956 = vmatpush2.msra.mxu0 0.0
    %957 = vmatprep.subr.mxu0 0.0
    %958 = vmatpush2.msra.mxu0 0.0
    %959 = vmatprep.subr.mxu0 0.0
    %960 = vmatpush2.msra.mxu0 0.0
    %961 = vmatprep.subr.mxu0 0.0
    %962 = vmatpush2.msra.mxu0 0.0
    %963 = vmatprep.subr.mxu0 0.0
    %964 = vmatpush2.msra.mxu0 0.0
    %965 = vmatprep.mubr.f32.mxu0 0.0
    %966 = vmatmul.mubr.f32.gmra.mxu0 %v900
    %v967 = vpop.f32.mrf.mxu0
    %v968 = vadd.f32 %v331, %v967
    %v969 = vpop.f32.mrf.mxu0
    %970 = vdwg.mxu0
    %v971 = vmax.f32 %v829, %v968
    %972 = vmatprep.subr.mxu0 0.0
    %973 = vmatpush1.msra.mxu0 %v236
    %974 = vmatprep.subr.mxu0 0.0
    %975 = vmatpush1.msra.mxu0 %v235
    %976 = vmatprep.subr.mxu0 0.0
    %977 = vmatpush1.msra.mxu0 %v234
    %978 = vmatprep.subr.mxu0 0.0
    %979 = vmatpush1.msra.mxu0 %v233
    %980 = vmatprep.subr.mxu0 0.0
    %981 = vmatpush1.msra.mxu0 %v232
    %982 = vmatprep.subr.mxu0 0.0
    %983 = vmatpush1.msra.mxu0 %v231
    %984 = vmatprep.subr.mxu0 0.0
    %985 = vmatpush1.msra.mxu0 %v230
    %986 = vmatprep.subr.mxu0 0.0
    %987 = vmatpush1.msra.mxu0 %v229
    %988 = vmatprep.subr.mxu0 0.0
    %989 = vmatpush1.msra.mxu0 %v228
    %990 = vmatprep.subr.mxu0 0.0
    %991 = vmatpush1.msra.mxu0 %v227
    %992 = vmatprep.subr.mxu0 0.0
    %993 = vmatpush1.msra.mxu0 %v226
    %994 = vmatprep.subr.mxu0 0.0
    %995 = vmatpush1.msra.mxu0 %v225
    %996 = vmatprep.subr.mxu0 0.0
    %997 = vmatpush1.msra.mxu0 %v224
    %998 = vmatprep.subr.mxu0 0.0
    %999 = vmatpush1.msra.mxu0 %v223
    %1000 = vmatprep.subr.mxu0 0.0
    %1001 = vmatpush1.msra.mxu0 %v222
    %1002 = vmatprep.subr.mxu0 0.0
    %1003 = vmatpush1.msra.mxu0 %v221
    %1004 = vmatprep.subr.mxu0 0.0
    %1005 = vmatpush2.msra.mxu0 0.0
    %1006 = vmatprep.subr.mxu0 0.0
    %1007 = vmatpush2.msra.mxu0 0.0
    %1008 = vmatprep.subr.mxu0 0.0
    %1009 = vmatpush2.msra.mxu0 0.0
    %1010 = vmatprep.subr.mxu0 0.0
    %1011 = vmatpush2.msra.mxu0 0.0
    %1012 = vmatprep.subr.mxu0 0.0
    %1013 = vmatpush2.msra.mxu0 0.0
    %1014 = vmatprep.subr.mxu0 0.0
    %1015 = vmatpush2.msra.mxu0 0.0
    %1016 = vmatprep.subr.mxu0 0.0
    %1017 = vmatpush2.msra.mxu0 0.0
    %1018 = vmatprep.subr.mxu0 0.0
    %1019 = vmatpush2.msra.mxu0 0.0
    %1020 = vmatprep.subr.mxu0 0.0
    %1021 = vmatpush2.msra.mxu0 0.0
    %1022 = vmatprep.subr.mxu0 0.0
    %1023 = vmatpush2.msra.mxu0 0.0
    %1024 = vmatprep.subr.mxu0 0.0
    %1025 = vmatpush2.msra.mxu0 0.0
    %1026 = vmatprep.subr.mxu0 0.0
    %1027 = vmatpush2.msra.mxu0 0.0
    %1028 = vmatprep.subr.mxu0 0.0
    %1029 = vmatpush2.msra.mxu0 0.0
    %1030 = vmatprep.subr.mxu0 0.0
    %1031 = vmatpush2.msra.mxu0 0.0
    %1032 = vmatprep.subr.mxu0 0.0
    %1033 = vmatpush2.msra.mxu0 0.0
    %1034 = vmatprep.subr.mxu0 0.0
    %1035 = vmatpush2.msra.mxu0 0.0
    %1036 = vmatprep.mubr.f32.mxu0 0.0
    %1037 = vmatmul.mubr.f32.gmra.mxu0 %v900
    %v1038 = vpop.f32.mrf.mxu0
    %v1039 = vadd.f32 %v208, %v1038
    %v1040 = vpop.f32.mrf.mxu0
    %1041 = vdwg.mxu0
    %v1042 = vmax.f32 %v1039, 0.0
    %1043 = vmatprep.subr.mxu0 0.0
    %1044 = vmatpush1.msra.mxu0 %v252
    %1045 = vmatprep.subr.mxu0 0.0
    %1046 = vmatpush1.msra.mxu0 %v251
    %1047 = vmatprep.subr.mxu0 0.0
    %1048 = vmatpush1.msra.mxu0 %v250
    %1049 = vmatprep.subr.mxu0 0.0
    %1050 = vmatpush1.msra.mxu0 %v249
    %1051 = vmatprep.subr.mxu0 0.0
    %1052 = vmatpush1.msra.mxu0 %v248
    %1053 = vmatprep.subr.mxu0 0.0
    %1054 = vmatpush1.msra.mxu0 %v247
    %1055 = vmatprep.subr.mxu0 0.0
    %1056 = vmatpush1.msra.mxu0 %v246
    %1057 = vmatprep.subr.mxu0 0.0
    %1058 = vmatpush1.msra.mxu0 %v245
    %1059 = vmatprep.subr.mxu0 0.0
    %1060 = vmatpush1.msra.mxu0 %v244
    %1061 = vmatprep.subr.mxu0 0.0
    %1062 = vmatpush1.msra.mxu0 %v243
    %1063 = vmatprep.subr.mxu0 0.0
    %1064 = vmatpush1.msra.mxu0 %v242
    %1065 = vmatprep.subr.mxu0 0.0
    %1066 = vmatpush1.msra.mxu0 %v241
    %1067 = vmatprep.subr.mxu0 0.0
    %1068 = vmatpush1.msra.mxu0 %v240
    %1069 = vmatprep.subr.mxu0 0.0
    %1070 = vmatpush1.msra.mxu0 %v239
    %1071 = vmatprep.subr.mxu0 0.0
    %1072 = vmatpush1.msra.mxu0 %v238
    %1073 = vmatprep.subr.mxu0 0.0
    %1074 = vmatpush1.msra.mxu0 %v237
    %1075 = vmatprep.subr.mxu0 0.0
    %1076 = vmatpush2.msra.mxu0 0.0
    %1077 = vmatprep.subr.mxu0 0.0
    %1078 = vmatpush2.msra.mxu0 0.0
    %1079 = vmatprep.subr.mxu0 0.0
    %1080 = vmatpush2.msra.mxu0 0.0
    %1081 = vmatprep.subr.mxu0 0.0
    %1082 = vmatpush2.msra.mxu0 0.0
    %1083 = vmatprep.subr.mxu0 0.0
    %1084 = vmatpush2.msra.mxu0 0.0
    %1085 = vmatprep.subr.mxu0 0.0
    %1086 = vmatpush2.msra.mxu0 0.0
    %1087 = vmatprep.subr.mxu0 0.0
    %1088 = vmatpush2.msra.mxu0 0.0
    %1089 = vmatprep.subr.mxu0 0.0
    %1090 = vmatpush2.msra.mxu0 0.0
    %1091 = vmatprep.subr.mxu0 0.0
    %1092 = vmatpush2.msra.mxu0 0.0
    %1093 = vmatprep.subr.mxu0 0.0
    %1094 = vmatpush2.msra.mxu0 0.0
    %1095 = vmatprep.subr.mxu0 0.0
    %1096 = vmatpush2.msra.mxu0 0.0
    %1097 = vmatprep.subr.mxu0 0.0
    %1098 = vmatpush2.msra.mxu0 0.0
    %1099 = vmatprep.subr.mxu0 0.0
    %1100 = vmatpush2.msra.mxu0 0.0
    %1101 = vmatprep.subr.mxu0 0.0
    %1102 = vmatpush2.msra.mxu0 0.0
    %1103 = vmatprep.subr.mxu0 0.0
    %1104 = vmatpush2.msra.mxu0 0.0
    %1105 = vmatprep.subr.mxu0 0.0
    %1106 = vmatpush2.msra.mxu0 0.0
    %1107 = vmatprep.mubr.f32.mxu0 0.0
    %1108 = vmatmul.mubr.f32.gmra.mxu0 %v1042
    %v1109 = vpop.f32.mrf.mxu0
    %v1110 = vadd.f32 %v331, %v1109
    %v1111 = vpop.f32.mrf.mxu0
    %1112 = vdwg.mxu0
    %v1113 = vmax.f32 %v971, %v1110
    %1114 = vmatprep.subr.mxu0 0.0
    %1115 = vmatpush1.msra.mxu0 %v236
    %1116 = vmatprep.subr.mxu0 0.0
    %1117 = vmatpush1.msra.mxu0 %v235
    %1118 = vmatprep.subr.mxu0 0.0
    %1119 = vmatpush1.msra.mxu0 %v234
    %1120 = vmatprep.subr.mxu0 0.0
    %1121 = vmatpush1.msra.mxu0 %v233
    %1122 = vmatprep.subr.mxu0 0.0
    %1123 = vmatpush1.msra.mxu0 %v232
    %1124 = vmatprep.subr.mxu0 0.0
    %1125 = vmatpush1.msra.mxu0 %v231
    %1126 = vmatprep.subr.mxu0 0.0
    %1127 = vmatpush1.msra.mxu0 %v230
    %1128 = vmatprep.subr.mxu0 0.0
    %1129 = vmatpush1.msra.mxu0 %v229
    %1130 = vmatprep.subr.mxu0 0.0
    %1131 = vmatpush1.msra.mxu0 %v228
    %1132 = vmatprep.subr.mxu0 0.0
    %1133 = vmatpush1.msra.mxu0 %v227
    %1134 = vmatprep.subr.mxu0 0.0
    %1135 = vmatpush1.msra.mxu0 %v226
    %1136 = vmatprep.subr.mxu0 0.0
    %1137 = vmatpush1.msra.mxu0 %v225
    %1138 = vmatprep.subr.mxu0 0.0
    %1139 = vmatpush1.msra.mxu0 %v224
    %1140 = vmatprep.subr.mxu0 0.0
    %1141 = vmatpush1.msra.mxu0 %v223
    %1142 = vmatprep.subr.mxu0 0.0
    %1143 = vmatpush1.msra.mxu0 %v222
    %1144 = vmatprep.subr.mxu0 0.0
    %1145 = vmatpush1.msra.mxu0 %v221
    %1146 = vmatprep.subr.mxu0 0.0
    %1147 = vmatpush2.msra.mxu0 0.0
    %1148 = vmatprep.subr.mxu0 0.0
    %1149 = vmatpush2.msra.mxu0 0.0
    %1150 = vmatprep.subr.mxu0 0.0
    %1151 = vmatpush2.msra.mxu0 0.0
    %1152 = vmatprep.subr.mxu0 0.0
    %1153 = vmatpush2.msra.mxu0 0.0
    %1154 = vmatprep.subr.mxu0 0.0
    %1155 = vmatpush2.msra.mxu0 0.0
    %1156 = vmatprep.subr.mxu0 0.0
    %1157 = vmatpush2.msra.mxu0 0.0
    %1158 = vmatprep.subr.mxu0 0.0
    %1159 = vmatpush2.msra.mxu0 0.0
    %1160 = vmatprep.subr.mxu0 0.0
    %1161 = vmatpush2.msra.mxu0 0.0
    %1162 = vmatprep.subr.mxu0 0.0
    %1163 = vmatpush2.msra.mxu0 0.0
    %1164 = vmatprep.subr.mxu0 0.0
    %1165 = vmatpush2.msra.mxu0 0.0
    %1166 = vmatprep.subr.mxu0 0.0
    %1167 = vmatpush2.msra.mxu0 0.0
    %1168 = vmatprep.subr.mxu0 0.0
    %1169 = vmatpush2.msra.mxu0 0.0
    %1170 = vmatprep.subr.mxu0 0.0
    %1171 = vmatpush2.msra.mxu0 0.0
    %1172 = vmatprep.subr.mxu0 0.0
    %1173 = vmatpush2.msra.mxu0 0.0
    %1174 = vmatprep.subr.mxu0 0.0
    %1175 = vmatpush2.msra.mxu0 0.0
    %1176 = vmatprep.subr.mxu0 0.0
    %1177 = vmatpush2.msra.mxu0 0.0
    %1178 = vmatprep.mubr.f32.mxu0 0.0
    %1179 = vmatmul.mubr.f32.gmra.mxu0 %v1042
    %v1180 = vpop.f32.mrf.mxu0
    %v1181 = vadd.f32 %v213, %v1180
    %v1182 = vpop.f32.mrf.mxu0
    %1183 = vdwg.mxu0
    %v1184 = vmax.f32 %v1181, 0.0
    %1185 = vmatprep.subr.mxu0 0.0
    %1186 = vmatpush1.msra.mxu0 %v252
    %1187 = vmatprep.subr.mxu0 0.0
    %1188 = vmatpush1.msra.mxu0 %v251
    %1189 = vmatprep.subr.mxu0 0.0
    %1190 = vmatpush1.msra.mxu0 %v250
    %1191 = vmatprep.subr.mxu0 0.0
    %1192 = vmatpush1.msra.mxu0 %v249
    %1193 = vmatprep.subr.mxu0 0.0
    %1194 = vmatpush1.msra.mxu0 %v248
    %1195 = vmatprep.subr.mxu0 0.0
    %1196 = vmatpush1.msra.mxu0 %v247
    %1197 = vmatprep.subr.mxu0 0.0
    %1198 = vmatpush1.msra.mxu0 %v246
    %1199 = vmatprep.subr.mxu0 0.0
    %1200 = vmatpush1.msra.mxu0 %v245
    %1201 = vmatprep.subr.mxu0 0.0
    %1202 = vmatpush1.msra.mxu0 %v244
    %1203 = vmatprep.subr.mxu0 0.0
    %1204 = vmatpush1.msra.mxu0 %v243
    %1205 = vmatprep.subr.mxu0 0.0
    %1206 = vmatpush1.msra.mxu0 %v242
    %1207 = vmatprep.subr.mxu0 0.0
    %1208 = vmatpush1.msra.mxu0 %v241
    %1209 = vmatprep.subr.mxu0 0.0
    %1210 = vmatpush1.msra.mxu0 %v240
    %1211 = vmatprep.subr.mxu0 0.0
    %1212 = vmatpush1.msra.mxu0 %v239
    %1213 = vmatprep.subr.mxu0 0.0
    %1214 = vmatpush1.msra.mxu0 %v238
    %1215 = vmatprep.subr.mxu0 0.0
    %1216 = vmatpush1.msra.mxu0 %v237
    %1217 = vmatprep.subr.mxu0 0.0
    %1218 = vmatpush2.msra.mxu0 0.0
    %1219 = vmatprep.subr.mxu0 0.0
    %1220 = vmatpush2.msra.mxu0 0.0
    %1221 = vmatprep.subr.mxu0 0.0
    %1222 = vmatpush2.msra.mxu0 0.0
    %1223 = vmatprep.subr.mxu0 0.0
    %1224 = vmatpush2.msra.mxu0 0.0
    %1225 = vmatprep.subr.mxu0 0.0
    %1226 = vmatpush2.msra.mxu0 0.0
    %1227 = vmatprep.subr.mxu0 0.0
    %1228 = vmatpush2.msra.mxu0 0.0
    %1229 = vmatprep.subr.mxu0 0.0
    %1230 = vmatpush2.msra.mxu0 0.0
    %1231 = vmatprep.subr.mxu0 0.0
    %1232 = vmatpush2.msra.mxu0 0.0
    %1233 = vmatprep.subr.mxu0 0.0
    %1234 = vmatpush2.msra.mxu0 0.0
    %1235 = vmatprep.subr.mxu0 0.0
    %1236 = vmatpush2.msra.mxu0 0.0
    %1237 = vmatprep.subr.mxu0 0.0
    %1238 = vmatpush2.msra.mxu0 0.0
    %1239 = vmatprep.subr.mxu0 0.0
    %1240 = vmatpush2.msra.mxu0 0.0
    %1241 = vmatprep.subr.mxu0 0.0
    %1242 = vmatpush2.msra.mxu0 0.0
    %1243 = vmatprep.subr.mxu0 0.0
    %1244 = vmatpush2.msra.mxu0 0.0
    %1245 = vmatprep.subr.mxu0 0.0
    %1246 = vmatpush2.msra.mxu0 0.0
    %1247 = vmatprep.subr.mxu0 0.0
    %1248 = vmatpush2.msra.mxu0 0.0
    %1249 = vmatprep.mubr.f32.mxu0 0.0
    %1250 = vmatmul.mubr.f32.gmra.mxu0 %v1184
    %v1251 = vpop.f32.mrf.mxu0
    %v1252 = vadd.f32 %v331, %v1251
    %v1253 = vpop.f32.mrf.mxu0
    %1254 = vdwg.mxu0
    %v1255 = vmax.f32 %v1113, %v1252
    %1256 = vmatprep.subr.mxu0 0.0
    %1257 = vmatpush1.msra.mxu0 %v236
    %1258 = vmatprep.subr.mxu0 0.0
    %1259 = vmatpush1.msra.mxu0 %v235
    %1260 = vmatprep.subr.mxu0 0.0
    %1261 = vmatpush1.msra.mxu0 %v234
    %1262 = vmatprep.subr.mxu0 0.0
    %1263 = vmatpush1.msra.mxu0 %v233
    %1264 = vmatprep.subr.mxu0 0.0
    %1265 = vmatpush1.msra.mxu0 %v232
    %1266 = vmatprep.subr.mxu0 0.0
    %1267 = vmatpush1.msra.mxu0 %v231
    %1268 = vmatprep.subr.mxu0 0.0
    %1269 = vmatpush1.msra.mxu0 %v230
    %1270 = vmatprep.subr.mxu0 0.0
    %1271 = vmatpush1.msra.mxu0 %v229
    %1272 = vmatprep.subr.mxu0 0.0
    %1273 = vmatpush1.msra.mxu0 %v228
    %1274 = vmatprep.subr.mxu0 0.0
    %1275 = vmatpush1.msra.mxu0 %v227
    %1276 = vmatprep.subr.mxu0 0.0
    %1277 = vmatpush1.msra.mxu0 %v226
    %1278 = vmatprep.subr.mxu0 0.0
    %1279 = vmatpush1.msra.mxu0 %v225
    %1280 = vmatprep.subr.mxu0 0.0
    %1281 = vmatpush1.msra.mxu0 %v224
    %1282 = vmatprep.subr.mxu0 0.0
    %1283 = vmatpush1.msra.mxu0 %v223
    %1284 = vmatprep.subr.mxu0 0.0
    %1285 = vmatpush1.msra.mxu0 %v222
    %1286 = vmatprep.subr.mxu0 0.0
    %1287 = vmatpush1.msra.mxu0 %v221
    %1288 = vmatprep.subr.mxu0 0.0
    %1289 = vmatpush2.msra.mxu0 0.0
    %1290 = vmatprep.subr.mxu0 0.0
    %1291 = vmatpush2.msra.mxu0 0.0
    %1292 = vmatprep.subr.mxu0 0.0
    %1293 = vmatpush2.msra.mxu0 0.0
    %1294 = vmatprep.subr.mxu0 0.0
    %1295 = vmatpush2.msra.mxu0 0.0
    %1296 = vmatprep.subr.mxu0 0.0
    %1297 = vmatpush2.msra.mxu0 0.0
    %1298 = vmatprep.subr.mxu0 0.0
    %1299 = vmatpush2.msra.mxu0 0.0
    %1300 = vmatprep.subr.mxu0 0.0
    %1301 = vmatpush2.msra.mxu0 0.0
    %1302 = vmatprep.subr.mxu0 0.0
    %1303 = vmatpush2.msra.mxu0 0.0
    %1304 = vmatprep.subr.mxu0 0.0
    %1305 = vmatpush2.msra.mxu0 0.0
    %1306 = vmatprep.subr.mxu0 0.0
    %1307 = vmatpush2.msra.mxu0 0.0
    %1308 = vmatprep.subr.mxu0 0.0
    %1309 = vmatpush2.msra.mxu0 0.0
    %1310 = vmatprep.subr.mxu0 0.0
    %1311 = vmatpush2.msra.mxu0 0.0
    %1312 = vmatprep.subr.mxu0 0.0
    %1313 = vmatpush2.msra.mxu0 0.0
    %1314 = vmatprep.subr.mxu0 0.0
    %1315 = vmatpush2.msra.mxu0 0.0
    %1316 = vmatprep.subr.mxu0 0.0
    %1317 = vmatpush2.msra.mxu0 0.0
    %1318 = vmatprep.subr.mxu0 0.0
    %1319 = vmatpush2.msra.mxu0 0.0
    %1320 = vmatprep.mubr.f32.mxu0 0.0
    %1321 = vmatmul.mubr.f32.gmra.mxu0 %v1184
    %v1322 = vpop.f32.mrf.mxu0
    %v1323 = vadd.f32 %v218, %v1322
    %v1324 = vpop.f32.mrf.mxu0
    %1325 = vdwg.mxu0
    %v1326 = vmax.f32 %v1323, 0.0
    %1327 = vmatprep.subr.mxu0 0.0
    %1328 = vmatpush1.msra.mxu0 %v252
    %1329 = vmatprep.subr.mxu0 0.0
    %1330 = vmatpush1.msra.mxu0 %v251
    %1331 = vmatprep.subr.mxu0 0.0
    %1332 = vmatpush1.msra.mxu0 %v250
    %1333 = vmatprep.subr.mxu0 0.0
    %1334 = vmatpush1.msra.mxu0 %v249
    %1335 = vmatprep.subr.mxu0 0.0
    %1336 = vmatpush1.msra.mxu0 %v248
    %1337 = vmatprep.subr.mxu0 0.0
    %1338 = vmatpush1.msra.mxu0 %v247
    %1339 = vmatprep.subr.mxu0 0.0
    %1340 = vmatpush1.msra.mxu0 %v246
    %1341 = vmatprep.subr.mxu0 0.0
    %1342 = vmatpush1.msra.mxu0 %v245
    %1343 = vmatprep.subr.mxu0 0.0
    %1344 = vmatpush1.msra.mxu0 %v244
    %1345 = vmatprep.subr.mxu0 0.0
    %1346 = vmatpush1.msra.mxu0 %v243
    %1347 = vmatprep.subr.mxu0 0.0
    %1348 = vmatpush1.msra.mxu0 %v242
    %1349 = vmatprep.subr.mxu0 0.0
    %1350 = vmatpush1.msra.mxu0 %v241
    %1351 = vmatprep.subr.mxu0 0.0
    %1352 = vmatpush1.msra.mxu0 %v240
    %1353 = vmatprep.subr.mxu0 0.0
    %1354 = vmatpush1.msra.mxu0 %v239
    %1355 = vmatprep.subr.mxu0 0.0
    %1356 = vmatpush1.msra.mxu0 %v238
    %1357 = vmatprep.subr.mxu0 0.0
    %1358 = vmatpush1.msra.mxu0 %v237
    %1359 = vmatprep.subr.mxu0 0.0
    %1360 = vmatpush2.msra.mxu0 0.0
    %1361 = vmatprep.subr.mxu0 0.0
    %1362 = vmatpush2.msra.mxu0 0.0
    %1363 = vmatprep.subr.mxu0 0.0
    %1364 = vmatpush2.msra.mxu0 0.0
    %1365 = vmatprep.subr.mxu0 0.0
    %1366 = vmatpush2.msra.mxu0 0.0
    %1367 = vmatprep.subr.mxu0 0.0
    %1368 = vmatpush2.msra.mxu0 0.0
    %1369 = vmatprep.subr.mxu0 0.0
    %1370 = vmatpush2.msra.mxu0 0.0
    %1371 = vmatprep.subr.mxu0 0.0
    %1372 = vmatpush2.msra.mxu0 0.0
    %1373 = vmatprep.subr.mxu0 0.0
    %1374 = vmatpush2.msra.mxu0 0.0
    %1375 = vmatprep.subr.mxu0 0.0
    %1376 = vmatpush2.msra.mxu0 0.0
    %1377 = vmatprep.subr.mxu0 0.0
    %1378 = vmatpush2.msra.mxu0 0.0
    %1379 = vmatprep.subr.mxu0 0.0
    %1380 = vmatpush2.msra.mxu0 0.0
    %1381 = vmatprep.subr.mxu0 0.0
    %1382 = vmatpush2.msra.mxu0 0.0
    %1383 = vmatprep.subr.mxu0 0.0
    %1384 = vmatpush2.msra.mxu0 0.0
    %1385 = vmatprep.subr.mxu0 0.0
    %1386 = vmatpush2.msra.mxu0 0.0
    %1387 = vmatprep.subr.mxu0 0.0
    %1388 = vmatpush2.msra.mxu0 0.0
    %1389 = vmatprep.subr.mxu0 0.0
    %1390 = vmatpush2.msra.mxu0 0.0
    %1391 = vmatprep.mubr.f32.mxu0 0.0
    %1392 = vmatmul.mubr.f32.gmra.mxu0 %v1326
    %v1393 = vpop.f32.mrf.mxu0
    %v1394 = vadd.f32 %v331, %v1393
    %v1395 = vpop.f32.mrf.mxu0
    %1396 = vdwg.mxu0
    %v1397 = vmax.f32 %v1255, %v1394
    %1398 = vst [vmem:[#allocation2] sm:$0xff] %v1326
    %1399 = vst [vmem:[#allocation3] sm:$0xff] %v1397
    // Predicated region
    $region46: #{tpu_custom_call.1} parent=1 // pred_check
      %p1400 = pneg %p79
    $region47: #{tpu_custom_call.1} parent=1 // pred_check_branch
      %1402 = sbr.rel (%p1400) target = $region49
    $region48: #{tpu_custom_call.1} parent=1 // pred_region
      %1403 = vst [vmem:[#allocation12] sm:$0xff] %v1397
    $region49: #{tpu_custom_call.1} parent=1 // pred_fallthru
      _
    // Predicated region
    $region50: #{tpu_custom_call.1} parent=1 // pred_check
      _
    $region51: #{tpu_custom_call.1} parent=1 // pred_check_branch
      %1405 = sbr.rel (0) target = $region53
    $region52: #{tpu_custom_call.1} parent=1 // pred_region
      %s1407 = ssub.s32 128, 128
      %1408 = vsyncadd [#allocation6], %s1407
      %s1410 = sshll.u32 [#allocation12], 4
      %s1411 = int_to_ptr.vmem [resolvable:$true] %s1410
      %1413 = dma.vmem_to_hbm [thread:$0]  %s1411, 128, %s6, [#allocation6]
    $region53: #{tpu_custom_call.1} parent=1 // pred_fallthru
      _
    // Predicated region
    $region54: #{tpu_custom_call.1} parent=1 // pred_check
      _
    $region55: #{tpu_custom_call.1} parent=1 // pred_check_branch
      %1415 = sbr.rel (0) target = $region57
    $region56: #{tpu_custom_call.1} parent=1 // pred_region
      %1416 = dma.done [#allocation6], 128
    $region57: #{tpu_custom_call.1} parent=1 // pred_fallthru
      _
    %1417 = vsyncpa [#allocation5], 1
    %1418 = vsyncpa [#allocation8], 1
    %1419 = vsyncpa [#allocation11], 1
    %1420 = vsyncpa [#allocation6], 1

</llo_original>
